<compile_context>
chip_gen: v7x
topology: tpu7x:2x2x1
jax: 0.10.0
libtpu: 0.0.40
codegen_flags: <defaults>
</compile_context>

<pallas_src>
import functools

import jax
import jax.numpy as jnp
from jax import lax
from jax.experimental import pallas as pl
from jax.experimental.pallas import tpu as pltpu


def _band_vq_kernel(x_ref, embed_ref, e2_ref, q_ref, idx_ref, res_ref):
    """One grid step = one (batch, time-block, band) tile.

    Band is the innermost grid axis; the residual for the current token block
    persists in a (D, TN) VMEM scratch across bands.
    """
    band = pl.program_id(2)

    @pl.when(band == 0)
    def _():
        res_ref[...] = jnp.zeros_like(res_ref)

    x = x_ref[...]                        # (D, TN)  channels on sublanes, time on lanes
    embed = embed_ref[band]               # (K, D)   this band's codebook (VMEM-resident)
    e2 = e2_ref[band]                     # (K, 1)   0.5 * ||e_k||^2

    inp = res_ref[...] + x                # (D, TN)

    # score[k, t] = e_k . inp_t - 0.5*||e_k||^2 ; argmax_k score == nearest codeword.
    score = lax.dot_general(embed, inp, (((1,), (0,)), ((), ())),
                            preferred_element_type=jnp.float32) - e2      # (K, TN)

    k_size = score.shape[0]
    # (K, 1) int32 iota column; broadcast in the select (no K x TN iota materialized).
    iota_col = lax.broadcasted_iota(jnp.int32, (k_size, 1), 0)
    max_s = jnp.max(score, axis=0, keepdims=True)                         # (1, TN)
    # masked[k, t] = k where score is maximal, else K.  Reused twice below.
    masked = jnp.where(score == max_s, iota_col, jnp.int32(k_size))       # (K, TN) i32
    idx = jnp.min(masked, axis=0, keepdims=True)                          # (1, TN) i32
    # Exactly one position per column satisfies masked == idx (row iota is unique).
    onehot = (masked == idx).astype(jnp.float32)                          # (K, TN)

    # Dequantize via one-hot matmul (exact row pick from the f32 codebook).
    quantized = lax.dot_general(embed, onehot, (((0,), (0,)), ((), ())),
                                preferred_element_type=jnp.float32)       # (D, TN)

    res_ref[...] = inp - quantized
    q_ref[...] = quantized
    idx_ref[pl.ds(band, 1), :] = idx


@functools.lru_cache(maxsize=None)
def _hw_params():
    """(max_time_tile, vmem_budget_bytes) derived from the local TPU generation."""
    vmem_cap = 128 * 1024 * 1024
    try:
        info = pltpu.get_tpu_info()
        vmem_cap = int(getattr(info, "vmem_capacity_bytes", vmem_cap))
    except Exception:
        pass
    # v7x-class parts expose ~64 MiB/TC; v5e/v6e expose 128 MiB.
    small_vmem = vmem_cap <= 80 * 1024 * 1024
    max_tn = 512 if small_vmem else 1024
    vmem_budget = int(vmem_cap * 0.8)          # leave headroom for Mosaic scratch
    return max_tn, vmem_budget


def _choose_tile_n(n: int, batch: int, max_tile: int) -> int:
    """Pick the time-tile size.

    Prefers the largest lane-aligned divisor of n that is <= max_tile; when
    batch == 1 it prefers a tile giving >= 2 time blocks (megacore sharding).
    If n has no suitable divisor, returns max_tile (the caller zero-pads n).
    """
    cands = [t for t in range(128, n, 128) if n % t == 0]
    cands.append(n)

    def rank(t):
        return (t <= max_tile, batch * (-(-n // t)) >= 2, t)

    best = max(cands, key=rank)
    if best <= max_tile:
        return best
    # No lane-aligned divisor <= max_tile: pad n up to a multiple of max_tile.
    return (max_tile // 128) * 128


@functools.partial(jax.jit,
                   static_argnames=("tn", "vmem_limit", "single_buffer_consts"))
def _bvq_call(x, embeds, *, tn, vmem_limit, single_buffer_consts):
    B, bands, D, n = x.shape
    K = embeds.shape[1]

    n_pad = -(-n // tn) * tn
    if n_pad != n:
        # Zero-pad the time axis; each token is quantized independently, so the
        # padded columns are simply sliced off afterwards.
        x = jnp.pad(x, ((0, 0), (0, 0), (0, 0), (0, n_pad - n)))
    nb = n_pad // tn

    # 0.5 * ||e||^2 per codeword, precomputed once (kept VMEM-resident).
    e2 = 0.5 * jnp.sum(embeds * embeds, axis=-1, keepdims=True)           # (bands, K, 1)

    const_kwargs = ({"pipeline_mode": pl.Buffered(1)}
                    if single_buffer_consts else {})

    cost = pl.CostEstimate(
        flops=4 * B * bands * n_pad * K * D,            # score + dequant matmuls
        transcendentals=0,
        bytes_accessed=4 * (2 * B * bands * D * n_pad + B * bands * n_pad
                            + bands * K * D + bands * K),
    )

    q, idx = pl.pallas_call(
        _band_vq_kernel,
        out_shape=(
            jax.ShapeDtypeStruct((B, bands, D, n_pad), jnp.float32),
            jax.ShapeDtypeStruct((B, bands, n_pad), jnp.int32),
        ),
        grid_spec=pltpu.PrefetchScalarGridSpec(
            num_scalar_prefetch=0,
            grid=(B, nb, bands),                     # band innermost (residual chain)
            in_specs=[
                pl.BlockSpec((pl.Squeezed(), pl.Squeezed(), D, tn),
                             lambda bi, t, bd: (bi, bd, 0, t)),
                pl.BlockSpec((bands, K, D), lambda bi, t, bd: (0, 0, 0),
                             **const_kwargs),                               # resident
                pl.BlockSpec((bands, K, 1), lambda bi, t, bd: (0, 0, 0),
                             **const_kwargs),                               # resident
            ],
            out_specs=[
                pl.BlockSpec((pl.Squeezed(), pl.Squeezed(), D, tn),
                             lambda bi, t, bd: (bi, bd, 0, t)),
                pl.BlockSpec((pl.Squeezed(), bands, tn),
                             lambda bi, t, bd: (bi, 0, t)),
            ],
            scratch_shapes=[pltpu.VMEM((D, tn), jnp.float32)],
        ),
        compiler_params=pltpu.CompilerParams(
            dimension_semantics=("parallel", "parallel", "arbitrary"),
            vmem_limit_bytes=vmem_limit,
        ),
        cost_estimate=cost,
    )(x, embeds, e2)

    if n_pad != n:
        q = q[..., :n]
        idx = idx[..., :n]

    all_loss = jnp.zeros((bands, 1), jnp.float32)    # eval-mode loss is [0.0] per band
    return q, idx, all_loss


def band_vector_quantization(x, embeds):
    """Forward pass of BandVectorQuantization (eval mode).

    Args:
        x:      (B, bands, D, n) float32  -- PyTorch layout, consumed natively.
        embeds: (bands, K, D)    float32  -- per-band codebooks.
    Returns:
        quantized_per: (B, bands, D, n) float32
        all_indices:   (B, bands, n)    int32
        all_loss:      (bands, 1)       float32 (zeros in eval mode)
    """
    B, bands, D, n = x.shape
    K = embeds.shape[1]

    max_tn, vmem_budget = _hw_params()
    tn = _choose_tile_n(n, B, max_tn)

    # VMEM budget: double-buffered x/q tiles + residual scratch + idx blocks +
    # resident codebooks (e2 lane-pads to K x 128 per band) + K x TN temporaries.
    tile_b = 4 * D * tn
    resident = 4 * bands * K * D + 4 * bands * K * 128
    est = (5 * tile_b + 2 * 4 * bands * tn + 2 * resident + 4 * 4 * K * tn)
    vmem_limit = int(min(max(2 * est, 32 * 1024 * 1024), vmem_budget))

    try:
        return _bvq_call(x, embeds, tn=tn, vmem_limit=vmem_limit,
                         single_buffer_consts=True)
    except Exception:
        # Fallback if pipeline_mode=pl.Buffered(1) is not supported by this
        # JAX/Mosaic build: identical kernel with default double-buffering.
        return _bvq_call(x, embeds, tn=tn, vmem_limit=vmem_limit,
                         single_buffer_consts=False)


def _reference_forward(x, embeds):
    """Pure-JAX reference of the same forward pass (faithful torch formula)."""
    B, bands, D, n = x.shape
    residual = jnp.zeros((B, D, n), jnp.float32)
    qs, idxs = [], []
    for i in range(bands):
        inp = residual + x[:, i]                          # (B, D, n)
        toks = jnp.transpose(inp, (0, 2, 1)).reshape(-1, D)
        e = embeds[i]
        dist = -(jnp.sum(toks ** 2, 1, keepdims=True)
                 - 2.0 * toks @ e.T
                 + jnp.sum(e ** 2, 1)[None, :])
        idx = jnp.argmax(dist, axis=-1)
        qv = e[idx]
        qv = jnp.transpose(qv.reshape(B, n, D), (0, 2, 1))
        residual = inp - qv
        qs.append(qv)
        idxs.append(idx.reshape(B, n).astype(jnp.int32))
    return jnp.stack(qs, 1), jnp.stack(idxs, 1)


if __name__ == "__main__":
    key = jax.random.PRNGKey(0)
    B, num_bands, dim, n, codebook_size = 2, 3, 32, 8, 64

    kx, ke = jax.random.split(key)
    x = jax.random.normal(kx, (B, num_bands, dim, n), dtype=jnp.float32)
    # deterministic kaiming-uniform-like codebook init: U(-sqrt(6/fan_in), +sqrt(6/fan_in))
    bound = (6.0 / dim) ** 0.5
    embeds = jax.random.uniform(ke, (num_bands, codebook_size, dim),
                                dtype=jnp.float32, minval=-bound, maxval=bound)

    quantized_per, all_indices, all_loss = band_vector_quantization(x, embeds)
    jax.block_until_ready((quantized_per, all_indices, all_loss))

    # sanity check against plain-JAX reference
    q_ref, idx_ref = _reference_forward(x, embeds)
    assert quantized_per.shape == (B, num_bands, dim, n)
    assert all_indices.shape == (B, num_bands, n)
    assert all_loss.shape == (num_bands, 1)
    assert jnp.allclose(quantized_per, q_ref, atol=1e-5), "quantized mismatch"
    assert jnp.array_equal(all_indices, idx_ref), "index mismatch"

    print("KERNEL_OK")
</pallas_src>

<mosaic_0001>
module attributes {stable_mosaic.version = 11 : i64} {
  func.func @_band_vq_kernel(%arg0: i32, %arg1: i32, %arg2: i32, %arg3: memref<1x1x32x8xf32, #tpu.memory_space<vmem>>, %arg4: memref<3x64x32xf32, #tpu.memory_space<vmem>>, %arg5: memref<3x64x1xf32, #tpu.memory_space<vmem>>, %arg6: memref<1x1x32x8xf32, #tpu.memory_space<vmem>>, %arg7: memref<1x3x8xi32, #tpu.memory_space<vmem>>, %arg8: memref<32x8xf32, #tpu.memory_space<vmem>>) attributes {dimension_semantics = [#tpu.dimension_semantics<parallel>, #tpu.dimension_semantics<parallel>, #tpu.dimension_semantics<arbitrary>], iteration_bounds = array<i64: 2, 1, 3>, scalar_prefetch = 0 : i64, scratch_operands = 1 : i64, tpu.core_type = #tpu.core_type<tc>, window_params = [{transform_indices = @transform_0, window_bounds = array<i64: 1, 1, 32, 8>}, {pipeline_mode = #tpu.pipeline_mode<synchronous>, transform_indices = @transform_1, window_bounds = array<i64: 3, 64, 32>}, {pipeline_mode = #tpu.pipeline_mode<synchronous>, transform_indices = @transform_2, window_bounds = array<i64: 3, 64, 1>}, {transform_indices = @transform_3, window_bounds = array<i64: 1, 1, 32, 8>}, {transform_indices = @transform_4, window_bounds = array<i64: 1, 3, 8>}]} {
    %c0_i32 = arith.constant 0 : i32
    %0 = arith.cmpi eq, %arg2, %c0_i32 : i32
    %1 = arith.extui %0 : i1 to i32
    %c0_i32_0 = arith.constant 0 : i32
    %2 = arith.cmpi ne, %1, %c0_i32_0 : i32
    scf.if %2 {
      %cst_21 = arith.constant 0.000000e+00 : f32
      %41 = vector.broadcast %cst_21 : f32 to vector<32x8xf32>
      %c0_22 = arith.constant 0 : index
      %c0_23 = arith.constant 0 : index
      %42 = vector.load %arg8[%c0_22, %c0_23] : memref<32x8xf32, #tpu.memory_space<vmem>>, vector<32x8xf32>
      tpu.vector_store %arg8[%c0_22, %c0_23], %41 {strides = array<i32>} : memref<32x8xf32, #tpu.memory_space<vmem>>, vector<32x8xf32>,
    } else {
    }
    %c0 = arith.constant 0 : index
    %c0_1 = arith.constant 0 : index
    %c0_2 = arith.constant 0 : index
    %c0_3 = arith.constant 0 : index
    %3 = vector.load %arg3[%c0, %c0_1, %c0_2, %c0_3] : memref<1x1x32x8xf32, #tpu.memory_space<vmem>>, vector<1x1x32x8xf32>
    %4 = vector.shape_cast %3 : vector<1x1x32x8xf32> to vector<32x8xf32>
    %5 = arith.index_cast %arg2 : i32 to index
    %c0_4 = arith.constant 0 : index
    %c0_5 = arith.constant 0 : index
    %6 = vector.load %arg4[%5, %c0_4, %c0_5] : memref<3x64x32xf32, #tpu.memory_space<vmem>>, vector<1x64x32xf32>
    %7 = vector.shape_cast %6 : vector<1x64x32xf32> to vector<64x32xf32>
    %8 = arith.index_cast %arg2 : i32 to index
    %c0_6 = arith.constant 0 : index
    %c0_7 = arith.constant 0 : index
    %9 = vector.load %arg5[%8, %c0_6, %c0_7] : memref<3x64x1xf32, #tpu.memory_space<vmem>>, vector<1x64x1xf32>
    %10 = vector.shape_cast %9 : vector<1x64x1xf32> to vector<64x1xf32>
    %c0_8 = arith.constant 0 : index
    %c0_9 = arith.constant 0 : index
    %11 = vector.load %arg8[%c0_8, %c0_9] : memref<32x8xf32, #tpu.memory_space<vmem>>, vector<32x8xf32>
    %12 = arith.addf %11, %4 : vector<32x8xf32>
    %cst = arith.constant dense<0.000000e+00> : vector<64x8xf32>
    %13 = tpu.matmul %7, %12, %cst {dimension_numbers = #tpu.dot_dimension_numbers<[1], [0], [0], [1], [0, 0, 1, 1], [], []>} : vector<64x32xf32>, vector<32x8xf32>, vector<64x8xf32> -> vector<64x8xf32>
    %14 = vector.broadcast %10 : vector<64x1xf32> to vector<64x8xf32>
    %15 = arith.subf %13, %14 : vector<64x8xf32>
    %16 = tpu.iota {dimensions = array<i32: 0>} : vector<64x1xi32>
    %cst_10 = arith.constant dense<0xFF800000> : vector<8xf32>
    %17 = vector.multi_reduction <maximumf>, %15, %cst_10 [0] : vector<64x8xf32> to vector<8xf32>
    %18 = vector.shape_cast %17 : vector<8xf32> to vector<1x8xf32>
    %19 = vector.broadcast %18 : vector<1x8xf32> to vector<64x8xf32>
    %20 = arith.cmpf oeq, %15, %19 : vector<64x8xf32>
    %c64_i32 = arith.constant 64 : i32
    %21 = vector.shape_cast %16 : vector<64x1xi32> to vector<64x1xi32>
    %22 = vector.broadcast %21 : vector<64x1xi32> to vector<64x8xi32>
    %23 = vector.broadcast %c64_i32 : i32 to vector<64x8xi32>
    %24 = arith.select %20, %22, %23 : vector<64x8xi1>, vector<64x8xi32>
    %cst_11 = arith.constant dense<2147483647> : vector<8xi32>
    %25 = vector.multi_reduction <minsi>, %24, %cst_11 [0] : vector<64x8xi32> to vector<8xi32>
    %26 = vector.shape_cast %25 : vector<8xi32> to vector<1x8xi32>
    %27 = vector.broadcast %26 : vector<1x8xi32> to vector<64x8xi32>
    %28 = arith.cmpi eq, %24, %27 : vector<64x8xi32>
    %29 = arith.extui %28 : vector<64x8xi1> to vector<64x8xi32>
    %30 = arith.sitofp %29 : vector<64x8xi32> to vector<64x8xf32>
    %cst_12 = arith.constant dense<0.000000e+00> : vector<32x8xf32>
    %31 = tpu.matmul %7, %30, %cst_12 {dimension_numbers = #tpu.dot_dimension_numbers<[0], [0], [1], [1], [0, 1, 1, 1], [], []>} : vector<64x32xf32>, vector<64x8xf32>, vector<32x8xf32> -> vector<32x8xf32>
    %32 = arith.subf %12, %31 : vector<32x8xf32>
    %c0_13 = arith.constant 0 : index
    %c0_14 = arith.constant 0 : index
    %33 = vector.load %arg8[%c0_13, %c0_14] : memref<32x8xf32, #tpu.memory_space<vmem>>, vector<32x8xf32>
    tpu.vector_store %arg8[%c0_13, %c0_14], %32 {strides = array<i32>} : memref<32x8xf32, #tpu.memory_space<vmem>>, vector<32x8xf32>,
    %c0_15 = arith.constant 0 : index
    %c0_16 = arith.constant 0 : index
    %c0_17 = arith.constant 0 : index
    %c0_18 = arith.constant 0 : index
    %34 = vector.load %arg6[%c0_15, %c0_16, %c0_17, %c0_18] : memref<1x1x32x8xf32, #tpu.memory_space<vmem>>, vector<1x1x32x8xf32>
    %35 = vector.shape_cast %34 : vector<1x1x32x8xf32> to vector<32x8xf32>
    %36 = vector.shape_cast %31 : vector<32x8xf32> to vector<1x1x32x8xf32>
    tpu.vector_store %arg6[%c0_15, %c0_16, %c0_17, %c0_18], %36 {strides = array<i32>} : memref<1x1x32x8xf32, #tpu.memory_space<vmem>>, vector<1x1x32x8xf32>,
    %c0_19 = arith.constant 0 : index
    %37 = arith.index_cast %arg2 : i32 to index
    %c0_20 = arith.constant 0 : index
    %38 = vector.load %arg7[%c0_19, %37, %c0_20] : memref<1x3x8xi32, #tpu.memory_space<vmem>>, vector<1x1x8xi32>
    %39 = vector.shape_cast %38 : vector<1x1x8xi32> to vector<1x8xi32>
    %40 = vector.shape_cast %26 : vector<1x8xi32> to vector<1x1x8xi32>
    tpu.vector_store %arg7[%c0_19, %37, %c0_20], %40 {strides = array<i32>} : memref<1x3x8xi32, #tpu.memory_space<vmem>>, vector<1x1x8xi32>,
    return
  }
  func.func @transform_0(%arg0: i32, %arg1: i32, %arg2: i32) -> (i32, i32, i32, i32) {
    %c0_i32 = arith.constant 0 : i32
    %c0_i32_0 = arith.constant 0 : i32
    return %arg0, %arg2, %c0_i32, %arg1 : i32, i32, i32, i32
  }
  func.func @transform_1(%arg0: i32, %arg1: i32, %arg2: i32) -> (i32, i32, i32) {
    %c0_i32 = arith.constant 0 : i32
    %c0_i32_0 = arith.constant 0 : i32
    %c0_i32_1 = arith.constant 0 : i32
    %c0_i32_2 = arith.constant 0 : i32
    return %c0_i32, %c0_i32_0, %c0_i32_1 : i32, i32, i32
  }
  func.func @transform_2(%arg0: i32, %arg1: i32, %arg2: i32) -> (i32, i32, i32) {
    %c0_i32 = arith.constant 0 : i32
    %c0_i32_0 = arith.constant 0 : i32
    %c0_i32_1 = arith.constant 0 : i32
    %c0_i32_2 = arith.constant 0 : i32
    return %c0_i32, %c0_i32_0, %c0_i32_1 : i32, i32, i32
  }
  func.func @transform_3(%arg0: i32, %arg1: i32, %arg2: i32) -> (i32, i32, i32, i32) {
    %c0_i32 = arith.constant 0 : i32
    %c0_i32_0 = arith.constant 0 : i32
    return %arg0, %arg2, %c0_i32, %arg1 : i32, i32, i32, i32
  }
  func.func @transform_4(%arg0: i32, %arg1: i32, %arg2: i32) -> (i32, i32, i32) {
    %c0_i32 = arith.constant 0 : i32
    %c0_i32_0 = arith.constant 0 : i32
    return %arg0, %c0_i32, %arg1 : i32, i32, i32
  }
}

module attributes {stable_mosaic.version = 11 : i64} {
  func.func @_band_vq_kernel(%arg0: i32, %arg1: i32, %arg2: i32, %arg3: memref<1x1x32x8xf32, #tpu.memory_space<vmem>>, %arg4: memref<3x64x32xf32, #tpu.memory_space<vmem>>, %arg5: memref<3x64x1xf32, #tpu.memory_space<vmem>>, %arg6: memref<1x1x32x8xf32, #tpu.memory_space<vmem>>, %arg7: memref<1x3x8xi32, #tpu.memory_space<vmem>>, %arg8: memref<32x8xf32, #tpu.memory_space<vmem>>) attributes {dimension_semantics = [#tpu.dimension_semantics<parallel>, #tpu.dimension_semantics<parallel>, #tpu.dimension_semantics<arbitrary>], iteration_bounds = array<i64: 2, 1, 3>, scalar_prefetch = 0 : i64, scratch_operands = 1 : i64, tpu.core_type = #tpu.core_type<tc>, window_params = [{transform_indices = @transform_0, window_bounds = array<i64: 1, 1, 32, 8>}, {pipeline_mode = #tpu.pipeline_mode<synchronous>, transform_indices = @transform_1, window_bounds = array<i64: 3, 64, 32>}, {pipeline_mode = #tpu.pipeline_mode<synchronous>, transform_indices = @transform_2, window_bounds = array<i64: 3, 64, 1>}, {transform_indices = @transform_3, window_bounds = array<i64: 1, 1, 32, 8>}, {transform_indices = @transform_4, window_bounds = array<i64: 1, 3, 8>}]} {
    %c0_i32 = arith.constant 0 : i32
    %0 = arith.cmpi eq, %arg2, %c0_i32 : i32
    %1 = arith.extui %0 : i1 to i32
    %c0_i32_0 = arith.constant 0 : i32
    %2 = arith.cmpi ne, %1, %c0_i32_0 : i32
    scf.if %2 {
      %cst_21 = arith.constant 0.000000e+00 : f32
      %41 = vector.broadcast %cst_21 : f32 to vector<32x8xf32>
      %c0_22 = arith.constant 0 : index
      %c0_23 = arith.constant 0 : index
      %42 = vector.load %arg8[%c0_22, %c0_23] : memref<32x8xf32, #tpu.memory_space<vmem>>, vector<32x8xf32>
      tpu.vector_store %arg8[%c0_22, %c0_23], %41 {strides = array<i32>} : memref<32x8xf32, #tpu.memory_space<vmem>>, vector<32x8xf32>,
    } else {
    }
    %c0 = arith.constant 0 : index
    %c0_1 = arith.constant 0 : index
    %c0_2 = arith.constant 0 : index
    %c0_3 = arith.constant 0 : index
    %3 = vector.load %arg3[%c0, %c0_1, %c0_2, %c0_3] : memref<1x1x32x8xf32, #tpu.memory_space<vmem>>, vector<1x1x32x8xf32>
    %4 = vector.shape_cast %3 : vector<1x1x32x8xf32> to vector<32x8xf32>
    %5 = arith.index_cast %arg2 : i32 to index
    %c0_4 = arith.constant 0 : index
    %c0_5 = arith.constant 0 : index
    %6 = vector.load %arg4[%5, %c0_4, %c0_5] : memref<3x64x32xf32, #tpu.memory_space<vmem>>, vector<1x64x32xf32>
    %7 = vector.shape_cast %6 : vector<1x64x32xf32> to vector<64x32xf32>
    %8 = arith.index_cast %arg2 : i32 to index
    %c0_6 = arith.constant 0 : index
    %c0_7 = arith.constant 0 : index
    %9 = vector.load %arg5[%8, %c0_6, %c0_7] : memref<3x64x1xf32, #tpu.memory_space<vmem>>, vector<1x64x1xf32>
    %10 = vector.shape_cast %9 : vector<1x64x1xf32> to vector<64x1xf32>
    %c0_8 = arith.constant 0 : index
    %c0_9 = arith.constant 0 : index
    %11 = vector.load %arg8[%c0_8, %c0_9] : memref<32x8xf32, #tpu.memory_space<vmem>>, vector<32x8xf32>
    %12 = arith.addf %11, %4 : vector<32x8xf32>
    %cst = arith.constant dense<0.000000e+00> : vector<64x8xf32>
    %13 = tpu.matmul %7, %12, %cst {dimension_numbers = #tpu.dot_dimension_numbers<[1], [0], [0], [1], [0, 0, 1, 1], [], []>} : vector<64x32xf32>, vector<32x8xf32>, vector<64x8xf32> -> vector<64x8xf32>
    %14 = vector.broadcast %10 : vector<64x1xf32> to vector<64x8xf32>
    %15 = arith.subf %13, %14 : vector<64x8xf32>
    %16 = tpu.iota {dimensions = array<i32: 0>} : vector<64x1xi32>
    %cst_10 = arith.constant dense<0xFF800000> : vector<8xf32>
    %17 = vector.multi_reduction <maximumf>, %15, %cst_10 [0] : vector<64x8xf32> to vector<8xf32>
    %18 = vector.shape_cast %17 : vector<8xf32> to vector<1x8xf32>
    %19 = vector.broadcast %18 : vector<1x8xf32> to vector<64x8xf32>
    %20 = arith.cmpf oeq, %15, %19 : vector<64x8xf32>
    %c64_i32 = arith.constant 64 : i32
    %21 = vector.shape_cast %16 : vector<64x1xi32> to vector<64x1xi32>
    %22 = vector.broadcast %21 : vector<64x1xi32> to vector<64x8xi32>
    %23 = vector.broadcast %c64_i32 : i32 to vector<64x8xi32>
    %24 = arith.select %20, %22, %23 : vector<64x8xi1>, vector<64x8xi32>
    %cst_11 = arith.constant dense<2147483647> : vector<8xi32>
    %25 = vector.multi_reduction <minsi>, %24, %cst_11 [0] : vector<64x8xi32> to vector<8xi32>
    %26 = vector.shape_cast %25 : vector<8xi32> to vector<1x8xi32>
    %27 = vector.broadcast %26 : vector<1x8xi32> to vector<64x8xi32>
    %28 = arith.cmpi eq, %24, %27 : vector<64x8xi32>
    %29 = arith.extui %28 : vector<64x8xi1> to vector<64x8xi32>
    %30 = arith.sitofp %29 : vector<64x8xi32> to vector<64x8xf32>
    %cst_12 = arith.constant dense<0.000000e+00> : vector<32x8xf32>
    %31 = tpu.matmul %7, %30, %cst_12 {dimension_numbers = #tpu.dot_dimension_numbers<[0], [0], [1], [1], [0, 1, 1, 1], [], []>} : vector<64x32xf32>, vector<64x8xf32>, vector<32x8xf32> -> vector<32x8xf32>
    %32 = arith.subf %12, %31 : vector<32x8xf32>
    %c0_13 = arith.constant 0 : index
    %c0_14 = arith.constant 0 : index
    %33 = vector.load %arg8[%c0_13, %c0_14] : memref<32x8xf32, #tpu.memory_space<vmem>>, vector<32x8xf32>
    tpu.vector_store %arg8[%c0_13, %c0_14], %32 {strides = array<i32>} : memref<32x8xf32, #tpu.memory_space<vmem>>, vector<32x8xf32>,
    %c0_15 = arith.constant 0 : index
    %c0_16 = arith.constant 0 : index
    %c0_17 = arith.constant 0 : index
    %c0_18 = arith.constant 0 : index
    %34 = vector.load %arg6[%c0_15, %c0_16, %c0_17, %c0_18] : memref<1x1x32x8xf32, #tpu.memory_space<vmem>>, vector<1x1x32x8xf32>
    %35 = vector.shape_cast %34 : vector<1x1x32x8xf32> to vector<32x8xf32>
    %36 = vector.shape_cast %31 : vector<32x8xf32> to vector<1x1x32x8xf32>
    tpu.vector_store %arg6[%c0_15, %c0_16, %c0_17, %c0_18], %36 {strides = array<i32>} : memref<1x1x32x8xf32, #tpu.memory_space<vmem>>, vector<1x1x32x8xf32>,
    %c0_19 = arith.constant 0 : index
    %37 = arith.index_cast %arg2 : i32 to index
    %c0_20 = arith.constant 0 : index
    %38 = vector.load %arg7[%c0_19, %37, %c0_20] : memref<1x3x8xi32, #tpu.memory_space<vmem>>, vector<1x1x8xi32>
    %39 = vector.shape_cast %38 : vector<1x1x8xi32> to vector<1x8xi32>
    %40 = vector.shape_cast %26 : vector<1x8xi32> to vector<1x1x8xi32>
    tpu.vector_store %arg7[%c0_19, %37, %c0_20], %40 {strides = array<i32>} : memref<1x3x8xi32, #tpu.memory_space<vmem>>, vector<1x1x8xi32>,
    return
  }
  func.func @transform_0(%arg0: i32, %arg1: i32, %arg2: i32) -> (i32, i32, i32, i32) {
    %c0_i32 = arith.constant 0 : i32
    %c0_i32_0 = arith.constant 0 : i32
    return %arg0, %arg2, %c0_i32, %arg1 : i32, i32, i32, i32
  }
  func.func @transform_1(%arg0: i32, %arg1: i32, %arg2: i32) -> (i32, i32, i32) {
    %c0_i32 = arith.constant 0 : i32
    %c0_i32_0 = arith.constant 0 : i32
    %c0_i32_1 = arith.constant 0 : i32
    %c0_i32_2 = arith.constant 0 : i32
    return %c0_i32, %c0_i32_0, %c0_i32_1 : i32, i32, i32
  }
  func.func @transform_2(%arg0: i32, %arg1: i32, %arg2: i32) -> (i32, i32, i32) {
    %c0_i32 = arith.constant 0 : i32
    %c0_i32_0 = arith.constant 0 : i32
    %c0_i32_1 = arith.constant 0 : i32
    %c0_i32_2 = arith.constant 0 : i32
    return %c0_i32, %c0_i32_0, %c0_i32_1 : i32, i32, i32
  }
  func.func @transform_3(%arg0: i32, %arg1: i32, %arg2: i32) -> (i32, i32, i32, i32) {
    %c0_i32 = arith.constant 0 : i32
    %c0_i32_0 = arith.constant 0 : i32
    return %arg0, %arg2, %c0_i32, %arg1 : i32, i32, i32, i32
  }
  func.func @transform_4(%arg0: i32, %arg1: i32, %arg2: i32) -> (i32, i32, i32) {
    %c0_i32 = arith.constant 0 : i32
    %c0_i32_0 = arith.constant 0 : i32
    return %arg0, %c0_i32, %arg1 : i32, i32, i32
  }
}

</mosaic_0001>

<llo_original>
// kernel: _bvq_call.1
$region0: #{_bvq_call.1}
  #allocation0 [shape = 'u32[]', space=smem, size = 0x4, offset = 0x4, fixed_abs, tag = 'smem constant byte address 0x4 - core index']
  #allocation1 [shape = 'u32[144,128]{1,0:T(1,128)}', space=vmem, size = 0x12000, scoped, tag = 'internal scratch']
  #allocation2 [shape = 'f32[32,8]{1,0:T(8,128)}', space=vmem, size = 0x4000, scoped, tag = 'scratch operand']
  %s0 = inlined_call_operand.vmem [shape: f32[2,3,32,8], index: 0, kind: input, shape index: {}]
  %s1 = inlined_call_operand.vmem [shape: f32[3,64,32], index: 1, kind: input, shape index: {}]
  %s2 = inlined_call_operand.vmem [shape: f32[3,64,1], index: 2, kind: input, shape index: {}]
  %s3 = inlined_call_operand.vmem [shape: f32[2,3,32,8], index: 3, kind: output, shape index: {0}]
  %s4 = inlined_call_operand.vmem [shape: s32[2,3,8], index: 4, kind: output, shape index: {1}]
  %5 = xla_tuple %s3, %s4
  %s6 = sld [smem:[#allocation0]]
  $region57: #{_bvq_call.1} parent=0
    _
  %s8 = ssub.s32 1, %s6
  %s9 = scalar_select 0, %s8, %s6
  loop: start=0, step=1, limit=8
  $region2: #{_bvq_call.1} parent=0 // loop_pre_header
    _
  $region3: #{_bvq_call.1} parent=0 // loop_header
    %s11 = sphi 0, %s15
    %p12 = scmp.ge.s32.totalorder %s11, 8
    %s18 = sphi 0, %s37
    %s19 = sphi 0, %s33
    %s20 = sphi 0, %s29
    %s21 = sphi 0, %s18
    %s22 = sphi 0, %s19
    %s23 = sphi 0, %s20
    %s24 = sphi 0, %s21
    %s25 = sphi 0, %s22
    %s26 = sphi 0, %s23
    %s44 = sphi 0, %s46
    %s47 = sphi 0, %s44
    %s48 = sphi 0, %s47
    %s64 = sphi 0, %s48
    %s68 = sphi 0, %s68
    %s70 = sphi 0, %s68
    %s71 = sphi 0, %s70
    %s85 = sphi 0, %s71
    %s89 = sphi 0, %s89
    %s91 = sphi 0, %s89
    %s92 = sphi 0, %s91
    %s106 = sphi 0, %s92
    %s116 = sphi 0, %s118
    %s119 = sphi 0, %s116
    %s120 = sphi 0, %s119
    %s136 = sphi 0, %s120
    %s144 = sphi 0, %s146
    %s147 = sphi 0, %s144
    %s148 = sphi 0, %s147
    %s164 = sphi 0, %s148
  $region4: #{_bvq_call.1} parent=0 // loop_header_branch
    %14 = sbr.rel (%p12) target = $region8
  $region5: #{_bvq_call.1} parent=0 // loop_body
    %s16 = ssub.s32 %s11, 1
    %s17 = ssub.s32 %s11, 2
    %s27 = sadd.s32 1, %s20
    %p28 = scmp.ge.s32.totalorder %s27, 3
    %s29 = scalar_select %p28, 0, %s27
    %s30 = sadd.s32 1, %s19
    %s31 = scalar_select %p28, %s30, %s19
    %p32 = scmp.ge.s32.totalorder %s31, 1
    %s33 = scalar_select %p32, 0, %s31
    %s34 = sadd.s32 1, %s18
    %s35 = scalar_select %p32, %s34, %s18
    %p36 = scmp.ge.s32.totalorder %s35, 2
    %s37 = scalar_select %p36, 0, %s35
    %s38 = ssub.s32 %s18, %s37
    %s39 = ssub.s32 %s20, %s29
    %s40 = sor.u32 %s38, %s39
    %s41 = ssub.s32 %s19, %s33
    %s42 = sor.u32 %s40, %s41
    %p43 = scmp.eq.s32.totalorder %s42, 0
    %s45 = sadd.s32 %s44, 1
    %s46 = scalar_select %p43, %s44, %s45
    %p49 = pneg %p43
    %p50 = scmp.eq.s32.totalorder %s11, 5
    %p51 = por %p49, %p50
    %p52 = scmp.ne.s32.totalorder %s44, %s47
    %p53 = scmp.eq.s32.totalorder %s11, 0
    %p54 = por %p52, %p53
    %p55 = scmp.ne.s32.totalorder %s44, %s47
    %p56 = scmp.eq.s32.totalorder %s16, 5
    %p57 = por %p55, %p56
    %p58 = scmp.ne.s32.totalorder %s47, %s48
    %p59 = scmp.eq.s32.totalorder %s16, 0
    %p60 = por %p58, %p59
    %p61 = scmp.ne.s32.totalorder %s47, %s48
    %p62 = scmp.eq.s32.totalorder %s17, 5
    %p63 = por %p61, %p62
    %p65 = scmp.ne.s32.totalorder %s48, %s64
    %p66 = scmp.eq.s32.totalorder %s17, 0
    %p67 = por %p65, %p66
    %s69 = sadd.s32 %s68, 1
    %p72 = scmp.eq.s32.totalorder %s11, 5
    %p73 = scmp.ne.s32.totalorder %s68, %s70
    %p74 = scmp.eq.s32.totalorder %s11, 0
    %p75 = por %p73, %p74
    %p76 = scmp.ne.s32.totalorder %s68, %s70
    %p77 = scmp.eq.s32.totalorder %s16, 5
    %p78 = por %p76, %p77
    %p79 = scmp.ne.s32.totalorder %s70, %s71
    %p80 = scmp.eq.s32.totalorder %s16, 0
    %p81 = por %p79, %p80
    %p82 = scmp.ne.s32.totalorder %s70, %s71
    %p83 = scmp.eq.s32.totalorder %s17, 5
    %p84 = por %p82, %p83
    %p86 = scmp.ne.s32.totalorder %s71, %s85
    %p87 = scmp.eq.s32.totalorder %s17, 0
    %p88 = por %p86, %p87
    %s90 = sadd.s32 %s89, 1
    %p93 = scmp.eq.s32.totalorder %s11, 5
    %p94 = scmp.ne.s32.totalorder %s89, %s91
    %p95 = scmp.eq.s32.totalorder %s11, 0
    %p96 = por %p94, %p95
    %p97 = scmp.ne.s32.totalorder %s89, %s91
    %p98 = scmp.eq.s32.totalorder %s16, 5
    %p99 = por %p97, %p98
    %p100 = scmp.ne.s32.totalorder %s91, %s92
    %p101 = scmp.eq.s32.totalorder %s16, 0
    %p102 = por %p100, %p101
    %p103 = scmp.ne.s32.totalorder %s91, %s92
    %p104 = scmp.eq.s32.totalorder %s17, 5
    %p105 = por %p103, %p104
    %p107 = scmp.ne.s32.totalorder %s92, %s106
    %p108 = scmp.eq.s32.totalorder %s17, 0
    %p109 = por %p107, %p108
    %s110 = ssub.s32 %s18, %s37
    %s111 = ssub.s32 %s20, %s29
    %s112 = sor.u32 %s110, %s111
    %s113 = ssub.s32 %s19, %s33
    %s114 = sor.u32 %s112, %s113
    %p115 = scmp.eq.s32.totalorder %s114, 0
    %s117 = sadd.s32 %s116, 1
    %s118 = scalar_select %p115, %s116, %s117
    %p121 = pneg %p115
    %p122 = scmp.eq.s32.totalorder %s11, 5
    %p123 = por %p121, %p122
    %p124 = scmp.ne.s32.totalorder %s116, %s119
    %p125 = scmp.eq.s32.totalorder %s11, 0
    %p126 = por %p124, %p125
    %p127 = scmp.ne.s32.totalorder %s116, %s119
    %p128 = scmp.eq.s32.totalorder %s16, 5
    %p129 = por %p127, %p128
    %p130 = scmp.ne.s32.totalorder %s119, %s120
    %p131 = scmp.eq.s32.totalorder %s16, 0
    %p132 = por %p130, %p131
    %p133 = scmp.ne.s32.totalorder %s119, %s120
    %p134 = scmp.eq.s32.totalorder %s17, 5
    %p135 = por %p133, %p134
    %p137 = scmp.ne.s32.totalorder %s120, %s136
    %p138 = scmp.eq.s32.totalorder %s17, 0
    %p139 = por %p137, %p138
    %s140 = ssub.s32 %s18, %s37
    %s141 = ssub.s32 %s19, %s33
    %s142 = sor.u32 %s140, %s141
    %p143 = scmp.eq.s32.totalorder %s142, 0
    %s145 = sadd.s32 %s144, 1
    %s146 = scalar_select %p143, %s144, %s145
    %p149 = pneg %p143
    %p150 = scmp.eq.s32.totalorder %s11, 5
    %p151 = por %p149, %p150
    %p152 = scmp.ne.s32.totalorder %s144, %s147
    %p153 = scmp.eq.s32.totalorder %s11, 0
    %p154 = por %p152, %p153
    %p155 = scmp.ne.s32.totalorder %s144, %s147
    %p156 = scmp.eq.s32.totalorder %s16, 5
    %p157 = por %p155, %p156
    %p158 = scmp.ne.s32.totalorder %s147, %s148
    %p159 = scmp.eq.s32.totalorder %s16, 0
    %p160 = por %p158, %p159
    %p161 = scmp.ne.s32.totalorder %s147, %s148
    %p162 = scmp.eq.s32.totalorder %s17, 5
    %p163 = por %p161, %p162
    %p165 = scmp.ne.s32.totalorder %s148, %s164
    %p166 = scmp.eq.s32.totalorder %s17, 0
    %p167 = por %p165, %p166
    %p168 = scmp.le.s32.totalorder 1, %s11
    %p169 = scmp.lt.s32.totalorder %s11, 7
    %p170 = pnand %p168, %p169
    %p171 = pneg %p170
    // Predicated region
    $region9: #{_bvq_call.1} parent=5 // pred_check
      _
    $region10: #{_bvq_call.1} parent=5 // pred_check_branch
      %173 = sbr.rel (%p170) target = $region12
    $region11: #{_bvq_call.1} parent=5 // pred_region
      %s174 = ssub.s32 %s11, 1
      // Predicated region
      $region13: #{_bvq_call.1} parent=11 // pred_check
        %p175 = pneg %p81
      $region14: #{_bvq_call.1} parent=11 // pred_check_branch
        %177 = sbr.rel (%p175) target = $region16
      $region15: #{_bvq_call.1} parent=11 // pred_region
        _
      $region16: #{_bvq_call.1} parent=11 // pred_fallthru
        _
      // Predicated region
      $region17: #{_bvq_call.1} parent=11 // pred_check
        %p178 = pneg %p102
      $region18: #{_bvq_call.1} parent=11 // pred_check_branch
        %180 = sbr.rel (%p178) target = $region20
      $region19: #{_bvq_call.1} parent=11 // pred_region
        _
      $region20: #{_bvq_call.1} parent=11 // pred_fallthru
        _
    $region12: #{_bvq_call.1} parent=5 // pred_fallthru
      _
    %p181 = scmp.lt.s32.totalorder %s11, 6
    // Predicated region
    $region21: #{_bvq_call.1} parent=5 // pred_check
      %p182 = pneg %p181
    $region22: #{_bvq_call.1} parent=5 // pred_check_branch
      %184 = sbr.rel (%p182) target = $region24
    $region23: #{_bvq_call.1} parent=5 // pred_region
      // Predicated region
      $region25: #{_bvq_call.1} parent=23 // pred_check
        %p185 = pneg %p54
      $region26: #{_bvq_call.1} parent=23 // pred_check_branch
        %187 = sbr.rel (%p185) target = $region28
      $region27: #{_bvq_call.1} parent=23 // pred_region
        %p188 = scmp.lt.s32.totalorder %s18, 1
        %s189 = scalar_select %p188, %s18, 1
        %p190 = scmp.lt.s32.totalorder %s20, 2
        %s191 = scalar_select %p190, %s20, 2
        %p192 = scmp.lt.s32.totalorder %s19, 0
        %s193 = scalar_select %p192, %s19, 0
        %s194 = smul.addr %s191, 4
        %s195 = sadd.s32 %s193, %s194
        %s196 = smul.addr %s189, 12
        %s197 = sadd.s32 %s195, %s196
        %s198 = smul.addr %s197, 8
        %s199 = scalar_lea.vmem %s0, %s198
      $region28: #{_bvq_call.1} parent=23 // pred_fallthru
        _
    $region24: #{_bvq_call.1} parent=5 // pred_fallthru
      _
    %p200 = scmp.le.s32.totalorder 1, %s11
    %p201 = scmp.lt.s32.totalorder %s11, 7
    %p202 = pnand %p200, %p201
    %p203 = pneg %p202
    // Predicated region
    $region29: #{_bvq_call.1} parent=5 // pred_check
      _
    $region30: #{_bvq_call.1} parent=5 // pred_check_branch
      %205 = sbr.rel (%p202) target = $region32
    $region31: #{_bvq_call.1} parent=5 // pred_region
      %s206 = ssub.s32 %s11, 1
      %p207 = scmp.lt.s32.totalorder %s21, 1
      %s208 = scalar_select %p207, %s21, 1
      %p209 = scmp.lt.s32.totalorder %s23, 2
      %s210 = scalar_select %p209, %s23, 2
      %p211 = scmp.lt.s32.totalorder %s22, 0
      %s212 = scalar_select %p211, %s22, 0
      %s213 = smul.addr %s210, 4
      %s214 = sadd.s32 %s212, %s213
      %s215 = smul.addr %s208, 12
      %s216 = sadd.s32 %s214, %s215
      %s217 = smul.addr %s216, 8
      %s218 = scalar_lea.vmem %s0, %s217
      %p219 = pneg %p60
      %p220 = pneg %p57
      %p221 = pneg %p81
      %p222 = pneg %p78
      %p223 = pneg %p102
      %p224 = pneg %p99
      %p225 = pneg %p132
      %p226 = pneg %p129
      %p227 = scmp.lt.s32.totalorder %s21, 1
      %s228 = scalar_select %p227, %s21, 1
      %p229 = scmp.lt.s32.totalorder %s23, 2
      %s230 = scalar_select %p229, %s23, 2
      %p231 = scmp.lt.s32.totalorder %s22, 0
      %s232 = scalar_select %p231, %s22, 0
      %s233 = smul.addr %s230, 4
      %s234 = sadd.s32 %s232, %s233
      %s235 = smul.addr %s228, 12
      %s236 = sadd.s32 %s234, %s235
      %s237 = smul.addr %s236, 8
      %s238 = scalar_lea.vmem %s3, %s237
      %p239 = pneg %p160
      %p240 = pneg %p157
      %p241 = scmp.lt.s32.totalorder %s21, 1
      %s242 = scalar_select %p241, %s21, 1
      %p243 = scmp.lt.s32.totalorder %s22, 0
      %s244 = scalar_select %p243, %s22, 0
      %s245 = sadd.s32 %s244, %s242
      %s246 = smul.addr %s245, 4
      %s247 = scalar_lea.vmem %s4, %s246
      %p248 = scmp.lt.s32.totalorder %s21, 1
      %s249 = scalar_select %p248, %s21, 1
      %p250 = scmp.lt.s32.totalorder %s23, 2
      %s251 = scalar_select %p250, %s23, 2
      %p252 = scmp.lt.s32.totalorder %s22, 0
      %s253 = scalar_select %p252, %s22, 0
      %s254 = smul.addr %s251, 4
      %s255 = sadd.s32 %s253, %s254
      %s256 = smul.addr %s249, 12
      %s257 = sadd.s32 %s255, %s256
      %s258 = smul.addr %s257, 8
      %s259 = scalar_lea.vmem %s0, %s258
      %p260 = scmp.lt.s32.totalorder %s21, 1
      %s261 = scalar_select %p260, %s21, 1
      %p262 = scmp.lt.s32.totalorder %s23, 2
      %s263 = scalar_select %p262, %s23, 2
      %p264 = scmp.lt.s32.totalorder %s22, 0
      %s265 = scalar_select %p264, %s22, 0
      %s266 = smul.addr %s263, 4
      %s267 = sadd.s32 %s265, %s266
      %s268 = smul.addr %s261, 12
      %s269 = sadd.s32 %s267, %s268
      %s270 = smul.addr %s269, 8
      %s271 = scalar_lea.vmem %s3, %s270
      %p272 = scmp.lt.s32.totalorder %s21, 1
      %s273 = scalar_select %p272, %s21, 1
      %p274 = scmp.lt.s32.totalorder %s22, 0
      %s275 = scalar_select %p274, %s22, 0
      %s276 = sadd.s32 %s275, %s273
      %s277 = smul.addr %s276, 4
      %s278 = scalar_lea.vmem %s4, %s277
      %p279 = scmp.eq.s32.totalorder %s23, 0
      // Predicated region
      $region33: #{_bvq_call.1} parent=31 // pred_check
        %p280 = pneg %p279
      $region34: #{_bvq_call.1} parent=31 // pred_check_branch
        %282 = sbr.rel (%p280) target = $region36
      $region35: #{_bvq_call.1} parent=31 // pred_region
        %vm283 = vcmask 64512
        %284 = vst.msk [vmem:[#allocation2] sm:$0xff] %vm283, 0.0
        %285 = vst.msk [vmem:[#allocation2 + $0x8] sm:$0xff] %vm283, 0.0
        %286 = vst.msk [vmem:[#allocation2 + $0x10] sm:$0xff] %vm283, 0.0
        %287 = vst.msk [vmem:[#allocation2 + $0x18] sm:$0xff] %vm283, 0.0
      $region36: #{_bvq_call.1} parent=31 // pred_fallthru
        _
      %v288 = vld [vmem:[%s259] sm:$0xff]
      %v289 = vld [vmem:[%s259 + $0x8] sm:$0xff]
      %v290 = vld [vmem:[%s259 + $0x10] sm:$0xff]
      %v291 = vld [vmem:[%s259 + $0x18] sm:$0xff]
      %s292 = smul.u32 %s23, 64
      %s293 = scalar_lea.vmem %s1, %s292
      %v294 = vld [vmem:[%s293] sm:$0xff]
      %v295 = vld [vmem:[%s293 + $0x8] sm:$0xff]
      %v296 = vld [vmem:[%s293 + $0x10] sm:$0xff]
      %v297 = vld [vmem:[%s293 + $0x18] sm:$0xff]
      %v298 = vld [vmem:[%s293 + $0x20] sm:$0xff]
      %v299 = vld [vmem:[%s293 + $0x28] sm:$0xff]
      %v300 = vld [vmem:[%s293 + $0x30] sm:$0xff]
      %v301 = vld [vmem:[%s293 + $0x38] sm:$0xff]
      %s302 = scalar_lea.vmem %s2, %s292
      %v303 = vld [vmem:[%s302] sm:$0xff]
      %v304 = vld [vmem:[%s302 + $0x8] sm:$0xff]
      %v305 = vld [vmem:[%s302 + $0x10] sm:$0xff]
      %v306 = vld [vmem:[%s302 + $0x18] sm:$0xff]
      %v307 = vld [vmem:[%s302 + $0x20] sm:$0xff]
      %v308 = vld [vmem:[%s302 + $0x28] sm:$0xff]
      %v309 = vld [vmem:[%s302 + $0x30] sm:$0xff]
      %v310 = vld [vmem:[%s302 + $0x38] sm:$0xff]
      %v311 = vld [vmem:[#allocation2] sm:$0xff]
      %v312 = vld [vmem:[#allocation2 + $0x8] sm:$0xff]
      %v313 = vld [vmem:[#allocation2 + $0x10] sm:$0xff]
      %v314 = vld [vmem:[#allocation2 + $0x18] sm:$0xff]
      %v315 = vadd.f32 %v311, %v288
      %v316 = vadd.f32 %v312, %v289
      %v317 = vadd.f32 %v313, %v290
      %v318 = vadd.f32 %v314, %v291
      %vm319 = vcmask 261120
      %v321 = vsel %vm319, %v294, 0
      %v324 = vsel %vm319, %v295, 0
      %v327 = vsel %vm319, %v296, 0
      %v330 = vsel %vm319, %v297, 0
      %v333 = vsel %vm319, %v298, 0
      %v336 = vsel %vm319, %v299, 0
      %v339 = vsel %vm319, %v300, 0
      %v342 = vsel %vm319, %v301, 0
      %344 = vmatprep.subr.mxu0 0.0
      %345 = vmatpush1.msra.mxu0 %v315
      %346 = vmatprep.subr.mxu0 0.0
      %347 = vmatpush1.msra.mxu0 %v316
      %348 = vmatprep.subr.mxu0 0.0
      %349 = vmatpush1.msra.mxu0 %v317
      %350 = vmatprep.subr.mxu0 0.0
      %351 = vmatpush1.msra.mxu0 %v318
      %352 = vmatprep.subr.mxu0 0.0
      %353 = vmatpush1.msra.mxu0 0.0
      %354 = vmatprep.subr.mxu0 0.0
      %355 = vmatpush1.msra.mxu0 0.0
      %356 = vmatprep.subr.mxu0 0.0
      %357 = vmatpush1.msra.mxu0 0.0
      %358 = vmatprep.subr.mxu0 0.0
      %359 = vmatpush1.msra.mxu0 0.0
      %360 = vmatprep.subr.mxu0 0.0
      %361 = vmatpush1.msra.mxu0 0.0
      %362 = vmatprep.subr.mxu0 0.0
      %363 = vmatpush1.msra.mxu0 0.0
      %364 = vmatprep.subr.mxu0 0.0
      %365 = vmatpush1.msra.mxu0 0.0
      %366 = vmatprep.subr.mxu0 0.0
      %367 = vmatpush1.msra.mxu0 0.0
      %368 = vmatprep.subr.mxu0 0.0
      %369 = vmatpush1.msra.mxu0 0.0
      %370 = vmatprep.subr.mxu0 0.0
      %371 = vmatpush1.msra.mxu0 0.0
      %372 = vmatprep.subr.mxu0 0.0
      %373 = vmatpush1.msra.mxu0 0.0
      %374 = vmatprep.subr.mxu0 0.0
      %375 = vmatpush1.msra.mxu0 0.0
      %376 = vmatprep.subr.mxu0 0.0
      %377 = vmatpush1.msra.mxu0 0.0
      %378 = vmatprep.subr.mxu0 0.0
      %379 = vmatpush1.msra.mxu0 0.0
      %380 = vmatprep.subr.mxu0 0.0
      %381 = vmatpush1.msra.mxu0 0.0
      %382 = vmatprep.subr.mxu0 0.0
      %383 = vmatpush1.msra.mxu0 0.0
      %384 = vmatprep.subr.mxu0 0.0
      %385 = vmatpush1.msra.mxu0 0.0
      %386 = vmatprep.subr.mxu0 0.0
      %387 = vmatpush1.msra.mxu0 0.0
      %388 = vmatprep.subr.mxu0 0.0
      %389 = vmatpush1.msra.mxu0 0.0
      %390 = vmatprep.subr.mxu0 0.0
      %391 = vmatpush1.msra.mxu0 0.0
      %392 = vmatprep.subr.mxu0 0.0
      %393 = vmatpush1.msra.mxu0 0.0
      %394 = vmatprep.subr.mxu0 0.0
      %395 = vmatpush1.msra.mxu0 0.0
      %396 = vmatprep.subr.mxu0 0.0
      %397 = vmatpush1.msra.mxu0 0.0
      %398 = vmatprep.subr.mxu0 0.0
      %399 = vmatpush1.msra.mxu0 0.0
      %400 = vmatprep.subr.mxu0 0.0
      %401 = vmatpush1.msra.mxu0 0.0
      %402 = vmatprep.subr.mxu0 0.0
      %403 = vmatpush1.msra.mxu0 0.0
      %404 = vmatprep.subr.mxu0 0.0
      %405 = vmatpush1.msra.mxu0 0.0
      %406 = vmatprep.subr.mxu0 0.0
      %407 = vmatpush1.msra.mxu0 0.0
      %408 = vmatprep.mubr.f32.mxu0 0.0
      %409 = vmatmul.mubr.f32.gmra.mrb[0].mxu0 %v321
      %v410 = vpop.f32.mrb[0].mxu0
      %v411 = vadd.f32 0.0, %v410
      %v412 = vpop.f32.mrb[0].mxu0
      %413 = vmatprep.mubr.f32.mxu0 0.0
      %414 = vmatmul.mubr.f32.gmra.mrb[0].mxu0 %v324
      %v415 = vpop.f32.mrb[0].mxu0
      %v416 = vadd.f32 0.0, %v415
      %v417 = vpop.f32.mrb[0].mxu0
      %418 = vmatprep.mubr.f32.mxu0 0.0
      %419 = vmatmul.mubr.f32.gmra.mrb[0].mxu0 %v327
      %v420 = vpop.f32.mrb[0].mxu0
      %v421 = vadd.f32 0.0, %v420
      %v422 = vpop.f32.mrb[0].mxu0
      %423 = vmatprep.mubr.f32.mxu0 0.0
      %424 = vmatmul.mubr.f32.gmra.mrb[0].mxu0 %v330
      %v425 = vpop.f32.mrb[0].mxu0
      %v426 = vadd.f32 0.0, %v425
      %v427 = vpop.f32.mrb[0].mxu0
      %428 = vmatprep.mubr.f32.mxu0 0.0
      %429 = vmatmul.mubr.f32.gmra.mrb[0].mxu0 %v333
      %v430 = vpop.f32.mrb[0].mxu0
      %v431 = vadd.f32 0.0, %v430
      %v432 = vpop.f32.mrb[0].mxu0
      %433 = vmatprep.mubr.f32.mxu0 0.0
      %434 = vmatmul.mubr.f32.gmra.mrb[0].mxu0 %v336
      %v435 = vpop.f32.mrb[0].mxu0
      %v436 = vadd.f32 0.0, %v435
      %v437 = vpop.f32.mrb[0].mxu0
      %438 = vmatprep.mubr.f32.mxu0 0.0
      %439 = vmatmul.mubr.f32.gmra.mrb[0].mxu0 %v339
      %v440 = vpop.f32.mrb[0].mxu0
      %v441 = vadd.f32 0.0, %v440
      %v442 = vpop.f32.mrb[0].mxu0
      %443 = vmatprep.mubr.f32.mxu0 0.0
      %444 = vmatmul.mubr.f32.gmra.mrb[0].mxu0 %v342
      %v445 = vpop.f32.mrb[0].mxu0
      %v446 = vadd.f32 0.0, %v445
      %v447 = vpop.f32.mrb[0].mxu0
      %448 = vdwg.mxu0
      %450 = vset.pattern.permute.xlu0 0
      %451 = vperm.xlu0 %450, %v303
      %v452 = vpop.permute.xlu0 %451
      %455 = vset.pattern.permute.xlu0 0
      %456 = vperm.xlu0 %455, %v304
      %v457 = vpop.permute.xlu0 %456
      %460 = vset.pattern.permute.xlu0 0
      %461 = vperm.xlu0 %460, %v305
      %v462 = vpop.permute.xlu0 %461
      %465 = vset.pattern.permute.xlu0 0
      %466 = vperm.xlu0 %465, %v306
      %v467 = vpop.permute.xlu0 %466
      %470 = vset.pattern.permute.xlu0 0
      %471 = vperm.xlu0 %470, %v307
      %v472 = vpop.permute.xlu0 %471
      %475 = vset.pattern.permute.xlu0 0
      %476 = vperm.xlu0 %475, %v308
      %v477 = vpop.permute.xlu0 %476
      %480 = vset.pattern.permute.xlu0 0
      %481 = vperm.xlu0 %480, %v309
      %v482 = vpop.permute.xlu0 %481
      %485 = vset.pattern.permute.xlu0 0
      %486 = vperm.xlu0 %485, %v310
      %v487 = vpop.permute.xlu0 %486
      %v489 = vsub.f32 %v411, %v452
      %v490 = vsub.f32 %v416, %v457
      %v491 = vsub.f32 %v421, %v462
      %v492 = vsub.f32 %v426, %v467
      %v493 = vsub.f32 %v431, %v472
      %v494 = vsub.f32 %v436, %v477
      %v495 = vsub.f32 %v441, %v482
      %v496 = vsub.f32 %v446, %v487
      %v497 = vlaneseq
      %v498 = vshrl.u32 %v497, 7
      %v499 = vadd.s32 %v498, 8
      %v500 = vadd.s32 %v498, 16
      %v501 = vadd.s32 %v498, 24
      %v502 = vadd.s32 %v498, 32
      %v503 = vadd.s32 %v498, 40
      %v504 = vadd.s32 %v498, 48
      %v505 = vadd.s32 %v498, 56
      %vm506 = vcmask 64512
      %v507 = vsel %vm506, %v489, -inf
      %v508 = vsel %vm506, %v490, -inf
      %v509 = vsel %vm506, %v491, -inf
      %v510 = vsel %vm506, %v492, -inf
      %v511 = vsel %vm506, %v493, -inf
      %v512 = vmax.f32 %v507, %v511
      %v513 = vsel %vm506, %v494, -inf
      %v514 = vmax.f32 %v508, %v513
      %v515 = vsel %vm506, %v495, -inf
      %v516 = vmax.f32 %v509, %v515
      %v517 = vsel %vm506, %v496, -inf
      %v518 = vmax.f32 %v510, %v517
      %v519 = vmax.f32 %v512, %v514
      %v520 = vmax.f32 %v516, %v518
      %v521 = vmax.f32 %v519, %v520
      %v522 = vrot.slane %v521, 4
      %v523 = vmax.f32 %v521, %v522
      %v524 = vrot.slane %v523, 2
      %v525 = vmax.f32 %v523, %v524
      %v526 = vrot.slane %v525, 1
      %v527 = vmax.f32 %v525, %v526
      %vm528 = vcmp.eq.f32.partialorder %v489, %v527
      %vm529 = vcmp.eq.f32.partialorder %v490, %v527
      %vm530 = vcmp.eq.f32.partialorder %v491, %v527
      %vm531 = vcmp.eq.f32.partialorder %v492, %v527
      %vm532 = vcmp.eq.f32.partialorder %v493, %v527
      %vm533 = vcmp.eq.f32.partialorder %v494, %v527
      %vm534 = vcmp.eq.f32.partialorder %v495, %v527
      %vm535 = vcmp.eq.f32.partialorder %v496, %v527
      %v536 = vsel %vm528, %v498, 64
      %v537 = vsel %vm529, %v499, 64
      %v538 = vsel %vm530, %v500, 64
      %v539 = vsel %vm531, %v501, 64
      %v540 = vsel %vm532, %v502, 64
      %v541 = vsel %vm533, %v503, 64
      %v542 = vsel %vm534, %v504, 64
      %v543 = vsel %vm535, %v505, 64
      %v544 = vsel %vm506, %v536, 2147483647
      %v545 = vsel %vm506, %v537, 2147483647
      %v546 = vsel %vm506, %v538, 2147483647
      %v547 = vsel %vm506, %v539, 2147483647
      %v548 = vsel %vm506, %v540, 2147483647
      %vm549 = vcmp.lt.s32.totalorder %v544, %v548
      %v550 = vsel %vm549, %v544, %v548
      %v551 = vsel %vm506, %v541, 2147483647
      %vm552 = vcmp.lt.s32.totalorder %v545, %v551
      %v553 = vsel %vm552, %v545, %v551
      %v554 = vsel %vm506, %v542, 2147483647
      %vm555 = vcmp.lt.s32.totalorder %v546, %v554
      %v556 = vsel %vm555, %v546, %v554
      %v557 = vsel %vm506, %v543, 2147483647
      %vm558 = vcmp.lt.s32.totalorder %v547, %v557
      %v559 = vsel %vm558, %v547, %v557
      %vm560 = vcmp.lt.s32.totalorder %v550, %v553
      %v561 = vsel %vm560, %v550, %v553
      %vm562 = vcmp.lt.s32.totalorder %v556, %v559
      %v563 = vsel %vm562, %v556, %v559
      %vm564 = vcmp.lt.s32.totalorder %v561, %v563
      %v565 = vsel %vm564, %v561, %v563
      %v566 = vrot.slane %v565, 4
      %vm567 = vcmp.lt.s32.totalorder %v565, %v566
      %v568 = vsel %vm567, %v565, %v566
      %v569 = vrot.slane %v568, 2
      %vm570 = vcmp.lt.s32.totalorder %v568, %v569
      %v571 = vsel %vm570, %v568, %v569
      %v572 = vrot.slane %v571, 1
      %vm573 = vcmp.lt.s32.totalorder %v571, %v572
      %v574 = vsel %vm573, %v571, %v572
      %vm575 = vcmp.eq.s32.totalorder %v536, %v574
      %vm576 = vcmp.eq.s32.totalorder %v537, %v574
      %vm577 = vcmp.eq.s32.totalorder %v538, %v574
      %vm578 = vcmp.eq.s32.totalorder %v539, %v574
      %vm579 = vcmp.eq.s32.totalorder %v540, %v574
      %vm580 = vcmp.eq.s32.totalorder %v541, %v574
      %vm581 = vcmp.eq.s32.totalorder %v542, %v574
      %vm582 = vcmp.eq.s32.totalorder %v543, %v574
      %v583 = vsel %vm575, 1, 0
      %v584 = vsel %vm576, 1, 0
      %v585 = vsel %vm577, 1, 0
      %v586 = vsel %vm578, 1, 0
      %v587 = vsel %vm579, 1, 0
      %v588 = vsel %vm580, 1, 0
      %v589 = vsel %vm581, 1, 0
      %v590 = vsel %vm582, 1, 0
      %v591 = vcvt.s32.f32 %v583
      %v592 = vcvt.s32.f32 %v584
      %v593 = vcvt.s32.f32 %v585
      %v594 = vcvt.s32.f32 %v586
      %v595 = vcvt.s32.f32 %v587
      %v596 = vcvt.s32.f32 %v588
      %v597 = vcvt.s32.f32 %v589
      %v598 = vcvt.s32.f32 %v590
      %599 = vxpose.xlu0.b32.start [1/16] %v294, 128
      %600 = vxpose.xlu0.b32.cont [2/16] %v295, 128
      %601 = vxpose.xlu0.b32.cont [3/16] %v296, 128
      %602 = vxpose.xlu0.b32.cont [4/16] %v297, 128
      %603 = vxpose.xlu0.b32.cont [5/16] %v298, 128
      %604 = vxpose.xlu0.b32.cont [6/16] %v299, 128
      %605 = vxpose.xlu0.b32.cont [7/16] %v300, 128
      %606 = vxpose.xlu0.b32.cont [8/16] %v301, 128
      %607 = vxpose.xlu0.b32.cont [9/16] 0.0, 128
      %608 = vxpose.xlu0.b32.cont [10/16] 0.0, 128
      %609 = vxpose.xlu0.b32.cont [11/16] 0.0, 128
      %610 = vxpose.xlu0.b32.cont [12/16] 0.0, 128
      %611 = vxpose.xlu0.b32.cont [13/16] 0.0, 128
      %612 = vxpose.xlu0.b32.cont [14/16] 0.0, 128
      %613 = vxpose.xlu0.b32.cont [15/16] 0.0, 128
      %614 = vxpose.xlu0.b32.end [16/16] 0.0, 128
      %v615 = vpop.trf.xlu0
      %v616 = vpop.trf.xlu0
      %v617 = vpop.trf.xlu0
      %v618 = vpop.trf.xlu0
      %v619 = vpop.trf.xlu0
      %v620 = vpop.trf.xlu0
      %v621 = vpop.trf.xlu0
      %v622 = vpop.trf.xlu0
      %v623 = vpop.trf.xlu0
      %v624 = vpop.trf.xlu0
      %v625 = vpop.trf.xlu0
      %v626 = vpop.trf.xlu0
      %v627 = vpop.trf.xlu0
      %v628 = vpop.trf.xlu0
      %v629 = vpop.trf.xlu0
      %v630 = vpop.trf.xlu0
      %vm631 = vcmask 523264
      %v633 = vsel %vm631, %v615, 0
      %v636 = vsel %vm631, %v616, 0
      %v639 = vsel %vm631, %v617, 0
      %v642 = vsel %vm631, %v618, 0
      %644 = vmatprep.subr.mxu0 0.0
      %645 = vmatpush1.msra.mxu0 %v591
      %646 = vmatprep.subr.mxu0 0.0
      %647 = vmatpush1.msra.mxu0 %v592
      %648 = vmatprep.subr.mxu0 0.0
      %649 = vmatpush1.msra.mxu0 %v593
      %650 = vmatprep.subr.mxu0 0.0
      %651 = vmatpush1.msra.mxu0 %v594
      %652 = vmatprep.subr.mxu0 0.0
      %653 = vmatpush1.msra.mxu0 %v595
      %654 = vmatprep.subr.mxu0 0.0
      %655 = vmatpush1.msra.mxu0 %v596
      %656 = vmatprep.subr.mxu0 0.0
      %657 = vmatpush1.msra.mxu0 %v597
      %658 = vmatprep.subr.mxu0 0.0
      %659 = vmatpush1.msra.mxu0 %v598
      %660 = vmatprep.subr.mxu0 0.0
      %661 = vmatpush1.msra.mxu0 0.0
      %662 = vmatprep.subr.mxu0 0.0
      %663 = vmatpush1.msra.mxu0 0.0
      %664 = vmatprep.subr.mxu0 0.0
      %665 = vmatpush1.msra.mxu0 0.0
      %666 = vmatprep.subr.mxu0 0.0
      %667 = vmatpush1.msra.mxu0 0.0
      %668 = vmatprep.subr.mxu0 0.0
      %669 = vmatpush1.msra.mxu0 0.0
      %670 = vmatprep.subr.mxu0 0.0
      %671 = vmatpush1.msra.mxu0 0.0
      %672 = vmatprep.subr.mxu0 0.0
      %673 = vmatpush1.msra.mxu0 0.0
      %674 = vmatprep.subr.mxu0 0.0
      %675 = vmatpush1.msra.mxu0 0.0
      %676 = vmatprep.subr.mxu0 0.0
      %677 = vmatpush1.msra.mxu0 0.0
      %678 = vmatprep.subr.mxu0 0.0
      %679 = vmatpush1.msra.mxu0 0.0
      %680 = vmatprep.subr.mxu0 0.0
      %681 = vmatpush1.msra.mxu0 0.0
      %682 = vmatprep.subr.mxu0 0.0
      %683 = vmatpush1.msra.mxu0 0.0
      %684 = vmatprep.subr.mxu0 0.0
      %685 = vmatpush1.msra.mxu0 0.0
      %686 = vmatprep.subr.mxu0 0.0
      %687 = vmatpush1.msra.mxu0 0.0
      %688 = vmatprep.subr.mxu0 0.0
      %689 = vmatpush1.msra.mxu0 0.0
      %690 = vmatprep.subr.mxu0 0.0
      %691 = vmatpush1.msra.mxu0 0.0
      %692 = vmatprep.subr.mxu0 0.0
      %693 = vmatpush1.msra.mxu0 0.0
      %694 = vmatprep.subr.mxu0 0.0
      %695 = vmatpush1.msra.mxu0 0.0
      %696 = vmatprep.subr.mxu0 0.0
      %697 = vmatpush1.msra.mxu0 0.0
      %698 = vmatprep.subr.mxu0 0.0
      %699 = vmatpush1.msra.mxu0 0.0
      %700 = vmatprep.subr.mxu0 0.0
      %701 = vmatpush1.msra.mxu0 0.0
      %702 = vmatprep.subr.mxu0 0.0
      %703 = vmatpush1.msra.mxu0 0.0
      %704 = vmatprep.subr.mxu0 0.0
      %705 = vmatpush1.msra.mxu0 0.0
      %706 = vmatprep.subr.mxu0 0.0
      %707 = vmatpush1.msra.mxu0 0.0
      %708 = vmatprep.mubr.f32.mxu0 0.0
      %709 = vmatmul.mubr.f32.gmra.mrb[0].mxu0 %v633
      %v710 = vpop.f32.mrb[0].mxu0
      %v711 = vadd.f32 0.0, %v710
      %v712 = vpop.f32.mrb[0].mxu0
      %713 = vmatprep.mubr.f32.mxu0 0.0
      %714 = vmatmul.mubr.f32.gmra.mrb[0].mxu0 %v636
      %v715 = vpop.f32.mrb[0].mxu0
      %v716 = vadd.f32 0.0, %v715
      %v717 = vpop.f32.mrb[0].mxu0
      %718 = vmatprep.mubr.f32.mxu0 0.0
      %719 = vmatmul.mubr.f32.gmra.mrb[0].mxu0 %v639
      %v720 = vpop.f32.mrb[0].mxu0
      %v721 = vadd.f32 0.0, %v720
      %v722 = vpop.f32.mrb[0].mxu0
      %723 = vmatprep.mubr.f32.mxu0 0.0
      %724 = vmatmul.mubr.f32.gmra.mrb[0].mxu0 %v642
      %v725 = vpop.f32.mrb[0].mxu0
      %v726 = vadd.f32 0.0, %v725
      %v727 = vpop.f32.mrb[0].mxu0
      %728 = vdwg.mxu0
      %v729 = vsub.f32 %v315, %v711
      %v730 = vsub.f32 %v316, %v716
      %v731 = vsub.f32 %v317, %v721
      %v732 = vsub.f32 %v318, %v726
      %733 = vst.msk [vmem:[#allocation2] sm:$0xff] %vm506, %v729
      %734 = vst.msk [vmem:[#allocation2 + $0x8] sm:$0xff] %vm506, %v730
      %735 = vst.msk [vmem:[#allocation2 + $0x10] sm:$0xff] %vm506, %v731
      %736 = vst.msk [vmem:[#allocation2 + $0x18] sm:$0xff] %vm506, %v732
      %737 = vst.msk [vmem:[%s271] sm:$0xff] %vm506, %v711
      %738 = vst.msk [vmem:[%s271 + $0x8] sm:$0xff] %vm506, %v716
      %739 = vst.msk [vmem:[%s271 + $0x10] sm:$0xff] %vm506, %v721
      %740 = vst.msk [vmem:[%s271 + $0x18] sm:$0xff] %vm506, %v726
      %s741 = scalar_lea.vmem %s278, %s23
      %vm742 = vcmask 57344
      %743 = vst.msk [vmem:[%s741] sm:$0x1] %vm742, %v574
      %p744 = scmp.lt.s32.totalorder %s21, 1
      %s745 = scalar_select %p744, %s21, 1
      %p746 = scmp.lt.s32.totalorder %s23, 2
      %s747 = scalar_select %p746, %s23, 2
      %p748 = scmp.lt.s32.totalorder %s22, 0
      %s749 = scalar_select %p748, %s22, 0
      %s750 = smul.addr %s747, 4
      %s751 = sadd.s32 %s749, %s750
      %s752 = smul.addr %s745, 12
      %s753 = sadd.s32 %s751, %s752
      %s754 = smul.addr %s753, 8
      %s755 = scalar_lea.vmem %s3, %s754
      %p756 = scmp.lt.s32.totalorder %s21, 1
      %s757 = scalar_select %p756, %s21, 1
      %p758 = scmp.lt.s32.totalorder %s22, 0
      %s759 = scalar_select %p758, %s22, 0
      %s760 = sadd.s32 %s759, %s757
      %s761 = smul.addr %s760, 4
      %s762 = scalar_lea.vmem %s4, %s761
      // Predicated region
      $region37: #{_bvq_call.1} parent=31 // pred_check
        %p763 = pneg %p129
      $region38: #{_bvq_call.1} parent=31 // pred_check_branch
        %765 = sbr.rel (%p763) target = $region40
      $region39: #{_bvq_call.1} parent=31 // pred_region
        _
      $region40: #{_bvq_call.1} parent=31 // pred_fallthru
        _
      // Predicated region
      $region41: #{_bvq_call.1} parent=31 // pred_check
        %p766 = pneg %p157
      $region42: #{_bvq_call.1} parent=31 // pred_check_branch
        %768 = sbr.rel (%p766) target = $region44
      $region43: #{_bvq_call.1} parent=31 // pred_region
        _
      $region44: #{_bvq_call.1} parent=31 // pred_fallthru
        _
    $region32: #{_bvq_call.1} parent=5 // pred_fallthru
      _
    %p769 = scmp.le.s32.totalorder 2, %s11
    // Predicated region
    $region45: #{_bvq_call.1} parent=5 // pred_check
      %p770 = pneg %p769
    $region46: #{_bvq_call.1} parent=5 // pred_check_branch
      %772 = sbr.rel (%p770) target = $region48
    $region47: #{_bvq_call.1} parent=5 // pred_region
      %s773 = ssub.s32 %s11, 2
      // Predicated region
      $region49: #{_bvq_call.1} parent=47 // pred_check
        %p774 = pneg %p135
      $region50: #{_bvq_call.1} parent=47 // pred_check_branch
        %776 = sbr.rel (%p774) target = $region52
      $region51: #{_bvq_call.1} parent=47 // pred_region
        %p777 = scmp.lt.s32.totalorder %s24, 1
        %s778 = scalar_select %p777, %s24, 1
        %p779 = scmp.lt.s32.totalorder %s26, 2
        %s780 = scalar_select %p779, %s26, 2
        %p781 = scmp.lt.s32.totalorder %s25, 0
        %s782 = scalar_select %p781, %s25, 0
        %s783 = smul.addr %s780, 4
        %s784 = sadd.s32 %s782, %s783
        %s785 = smul.addr %s778, 12
        %s786 = sadd.s32 %s784, %s785
        %s787 = smul.addr %s786, 8
        %s788 = scalar_lea.vmem %s3, %s787
      $region52: #{_bvq_call.1} parent=47 // pred_fallthru
        _
      // Predicated region
      $region53: #{_bvq_call.1} parent=47 // pred_check
        %p789 = pneg %p163
      $region54: #{_bvq_call.1} parent=47 // pred_check_branch
        %791 = sbr.rel (%p789) target = $region56
      $region55: #{_bvq_call.1} parent=47 // pred_region
        %p792 = scmp.lt.s32.totalorder %s24, 1
        %s793 = scalar_select %p792, %s24, 1
        %p794 = scmp.lt.s32.totalorder %s25, 0
        %s795 = scalar_select %p794, %s25, 0
        %s796 = sadd.s32 %s795, %s793
        %s797 = smul.addr %s796, 4
        %s798 = scalar_lea.vmem %s4, %s797
      $region56: #{_bvq_call.1} parent=47 // pred_fallthru
        _
    $region48: #{_bvq_call.1} parent=5 // pred_fallthru
      _
  $region6: #{_bvq_call.1} parent=0 // loop_footer
    %s15 = sadd.s32 1, %s11
  $region7: #{_bvq_call.1} parent=0 // loop_footer_branch
    %10 = sbr.rel target = $region3
  $region8: #{_bvq_call.1} parent=0 // loop_exit
    _

// kernel: _bvq_call.1
$region0: #{_bvq_call.1}
  #allocation0 [shape = 'u32[]', space=smem, size = 0x4, offset = 0x4, fixed_abs, tag = 'smem constant byte address 0x4 - core index']
  #allocation1 [shape = 'u32[144,128]{1,0:T(1,128)}', space=vmem, size = 0x12000, scoped, tag = 'internal scratch']
  #allocation2 [shape = 'f32[32,8]{1,0:T(8,128)}', space=vmem, size = 0x4000, scoped, tag = 'scratch operand']
  %s0 = inlined_call_operand.vmem [shape: f32[2,3,32,8], index: 0, kind: input, shape index: {}]
  %s1 = inlined_call_operand.vmem [shape: f32[3,64,32], index: 1, kind: input, shape index: {}]
  %s2 = inlined_call_operand.vmem [shape: f32[3,64,1], index: 2, kind: input, shape index: {}]
  %s3 = inlined_call_operand.vmem [shape: f32[2,3,32,8], index: 3, kind: output, shape index: {0}]
  %s4 = inlined_call_operand.vmem [shape: s32[2,3,8], index: 4, kind: output, shape index: {1}]
  %5 = xla_tuple %s3, %s4
  %s6 = sld [smem:[#allocation0]]
  $region57: #{_bvq_call.1} parent=0
    _
  %s8 = ssub.s32 1, %s6
  %s9 = scalar_select 0, %s8, %s6
  loop: start=0, step=1, limit=8
  $region2: #{_bvq_call.1} parent=0 // loop_pre_header
    _
  $region3: #{_bvq_call.1} parent=0 // loop_header
    %s11 = sphi 0, %s15
    %p12 = scmp.ge.s32.totalorder %s11, 8
    %s18 = sphi 0, %s37
    %s19 = sphi 0, %s33
    %s20 = sphi 0, %s29
    %s21 = sphi 0, %s18
    %s22 = sphi 0, %s19
    %s23 = sphi 0, %s20
    %s24 = sphi 0, %s21
    %s25 = sphi 0, %s22
    %s26 = sphi 0, %s23
    %s44 = sphi 0, %s46
    %s47 = sphi 0, %s44
    %s48 = sphi 0, %s47
    %s64 = sphi 0, %s48
    %s68 = sphi 0, %s68
    %s70 = sphi 0, %s68
    %s71 = sphi 0, %s70
    %s85 = sphi 0, %s71
    %s89 = sphi 0, %s89
    %s91 = sphi 0, %s89
    %s92 = sphi 0, %s91
    %s106 = sphi 0, %s92
    %s116 = sphi 0, %s118
    %s119 = sphi 0, %s116
    %s120 = sphi 0, %s119
    %s136 = sphi 0, %s120
    %s144 = sphi 0, %s146
    %s147 = sphi 0, %s144
    %s148 = sphi 0, %s147
    %s164 = sphi 0, %s148
  $region4: #{_bvq_call.1} parent=0 // loop_header_branch
    %14 = sbr.rel (%p12) target = $region8
  $region5: #{_bvq_call.1} parent=0 // loop_body
    %s16 = ssub.s32 %s11, 1
    %s17 = ssub.s32 %s11, 2
    %s27 = sadd.s32 1, %s20
    %p28 = scmp.ge.s32.totalorder %s27, 3
    %s29 = scalar_select %p28, 0, %s27
    %s30 = sadd.s32 1, %s19
    %s31 = scalar_select %p28, %s30, %s19
    %p32 = scmp.ge.s32.totalorder %s31, 1
    %s33 = scalar_select %p32, 0, %s31
    %s34 = sadd.s32 1, %s18
    %s35 = scalar_select %p32, %s34, %s18
    %p36 = scmp.ge.s32.totalorder %s35, 2
    %s37 = scalar_select %p36, 0, %s35
    %s38 = ssub.s32 %s18, %s37
    %s39 = ssub.s32 %s20, %s29
    %s40 = sor.u32 %s38, %s39
    %s41 = ssub.s32 %s19, %s33
    %s42 = sor.u32 %s40, %s41
    %p43 = scmp.eq.s32.totalorder %s42, 0
    %s45 = sadd.s32 %s44, 1
    %s46 = scalar_select %p43, %s44, %s45
    %p49 = pneg %p43
    %p50 = scmp.eq.s32.totalorder %s11, 5
    %p51 = por %p49, %p50
    %p52 = scmp.ne.s32.totalorder %s44, %s47
    %p53 = scmp.eq.s32.totalorder %s11, 0
    %p54 = por %p52, %p53
    %p55 = scmp.ne.s32.totalorder %s44, %s47
    %p56 = scmp.eq.s32.totalorder %s16, 5
    %p57 = por %p55, %p56
    %p58 = scmp.ne.s32.totalorder %s47, %s48
    %p59 = scmp.eq.s32.totalorder %s16, 0
    %p60 = por %p58, %p59
    %p61 = scmp.ne.s32.totalorder %s47, %s48
    %p62 = scmp.eq.s32.totalorder %s17, 5
    %p63 = por %p61, %p62
    %p65 = scmp.ne.s32.totalorder %s48, %s64
    %p66 = scmp.eq.s32.totalorder %s17, 0
    %p67 = por %p65, %p66
    %s69 = sadd.s32 %s68, 1
    %p72 = scmp.eq.s32.totalorder %s11, 5
    %p73 = scmp.ne.s32.totalorder %s68, %s70
    %p74 = scmp.eq.s32.totalorder %s11, 0
    %p75 = por %p73, %p74
    %p76 = scmp.ne.s32.totalorder %s68, %s70
    %p77 = scmp.eq.s32.totalorder %s16, 5
    %p78 = por %p76, %p77
    %p79 = scmp.ne.s32.totalorder %s70, %s71
    %p80 = scmp.eq.s32.totalorder %s16, 0
    %p81 = por %p79, %p80
    %p82 = scmp.ne.s32.totalorder %s70, %s71
    %p83 = scmp.eq.s32.totalorder %s17, 5
    %p84 = por %p82, %p83
    %p86 = scmp.ne.s32.totalorder %s71, %s85
    %p87 = scmp.eq.s32.totalorder %s17, 0
    %p88 = por %p86, %p87
    %s90 = sadd.s32 %s89, 1
    %p93 = scmp.eq.s32.totalorder %s11, 5
    %p94 = scmp.ne.s32.totalorder %s89, %s91
    %p95 = scmp.eq.s32.totalorder %s11, 0
    %p96 = por %p94, %p95
    %p97 = scmp.ne.s32.totalorder %s89, %s91
    %p98 = scmp.eq.s32.totalorder %s16, 5
    %p99 = por %p97, %p98
    %p100 = scmp.ne.s32.totalorder %s91, %s92
    %p101 = scmp.eq.s32.totalorder %s16, 0
    %p102 = por %p100, %p101
    %p103 = scmp.ne.s32.totalorder %s91, %s92
    %p104 = scmp.eq.s32.totalorder %s17, 5
    %p105 = por %p103, %p104
    %p107 = scmp.ne.s32.totalorder %s92, %s106
    %p108 = scmp.eq.s32.totalorder %s17, 0
    %p109 = por %p107, %p108
    %s110 = ssub.s32 %s18, %s37
    %s111 = ssub.s32 %s20, %s29
    %s112 = sor.u32 %s110, %s111
    %s113 = ssub.s32 %s19, %s33
    %s114 = sor.u32 %s112, %s113
    %p115 = scmp.eq.s32.totalorder %s114, 0
    %s117 = sadd.s32 %s116, 1
    %s118 = scalar_select %p115, %s116, %s117
    %p121 = pneg %p115
    %p122 = scmp.eq.s32.totalorder %s11, 5
    %p123 = por %p121, %p122
    %p124 = scmp.ne.s32.totalorder %s116, %s119
    %p125 = scmp.eq.s32.totalorder %s11, 0
    %p126 = por %p124, %p125
    %p127 = scmp.ne.s32.totalorder %s116, %s119
    %p128 = scmp.eq.s32.totalorder %s16, 5
    %p129 = por %p127, %p128
    %p130 = scmp.ne.s32.totalorder %s119, %s120
    %p131 = scmp.eq.s32.totalorder %s16, 0
    %p132 = por %p130, %p131
    %p133 = scmp.ne.s32.totalorder %s119, %s120
    %p134 = scmp.eq.s32.totalorder %s17, 5
    %p135 = por %p133, %p134
    %p137 = scmp.ne.s32.totalorder %s120, %s136
    %p138 = scmp.eq.s32.totalorder %s17, 0
    %p139 = por %p137, %p138
    %s140 = ssub.s32 %s18, %s37
    %s141 = ssub.s32 %s19, %s33
    %s142 = sor.u32 %s140, %s141
    %p143 = scmp.eq.s32.totalorder %s142, 0
    %s145 = sadd.s32 %s144, 1
    %s146 = scalar_select %p143, %s144, %s145
    %p149 = pneg %p143
    %p150 = scmp.eq.s32.totalorder %s11, 5
    %p151 = por %p149, %p150
    %p152 = scmp.ne.s32.totalorder %s144, %s147
    %p153 = scmp.eq.s32.totalorder %s11, 0
    %p154 = por %p152, %p153
    %p155 = scmp.ne.s32.totalorder %s144, %s147
    %p156 = scmp.eq.s32.totalorder %s16, 5
    %p157 = por %p155, %p156
    %p158 = scmp.ne.s32.totalorder %s147, %s148
    %p159 = scmp.eq.s32.totalorder %s16, 0
    %p160 = por %p158, %p159
    %p161 = scmp.ne.s32.totalorder %s147, %s148
    %p162 = scmp.eq.s32.totalorder %s17, 5
    %p163 = por %p161, %p162
    %p165 = scmp.ne.s32.totalorder %s148, %s164
    %p166 = scmp.eq.s32.totalorder %s17, 0
    %p167 = por %p165, %p166
    %p168 = scmp.le.s32.totalorder 1, %s11
    %p169 = scmp.lt.s32.totalorder %s11, 7
    %p170 = pnand %p168, %p169
    %p171 = pneg %p170
    // Predicated region
    $region9: #{_bvq_call.1} parent=5 // pred_check
      _
    $region10: #{_bvq_call.1} parent=5 // pred_check_branch
      %173 = sbr.rel (%p170) target = $region12
    $region11: #{_bvq_call.1} parent=5 // pred_region
      %s174 = ssub.s32 %s11, 1
      // Predicated region
      $region13: #{_bvq_call.1} parent=11 // pred_check
        %p175 = pneg %p81
      $region14: #{_bvq_call.1} parent=11 // pred_check_branch
        %177 = sbr.rel (%p175) target = $region16
      $region15: #{_bvq_call.1} parent=11 // pred_region
        _
      $region16: #{_bvq_call.1} parent=11 // pred_fallthru
        _
      // Predicated region
      $region17: #{_bvq_call.1} parent=11 // pred_check
        %p178 = pneg %p102
      $region18: #{_bvq_call.1} parent=11 // pred_check_branch
        %180 = sbr.rel (%p178) target = $region20
      $region19: #{_bvq_call.1} parent=11 // pred_region
        _
      $region20: #{_bvq_call.1} parent=11 // pred_fallthru
        _
    $region12: #{_bvq_call.1} parent=5 // pred_fallthru
      _
    %p181 = scmp.lt.s32.totalorder %s11, 6
    // Predicated region
    $region21: #{_bvq_call.1} parent=5 // pred_check
      %p182 = pneg %p181
    $region22: #{_bvq_call.1} parent=5 // pred_check_branch
      %184 = sbr.rel (%p182) target = $region24
    $region23: #{_bvq_call.1} parent=5 // pred_region
      // Predicated region
      $region25: #{_bvq_call.1} parent=23 // pred_check
        %p185 = pneg %p54
      $region26: #{_bvq_call.1} parent=23 // pred_check_branch
        %187 = sbr.rel (%p185) target = $region28
      $region27: #{_bvq_call.1} parent=23 // pred_region
        %p188 = scmp.lt.s32.totalorder %s18, 1
        %s189 = scalar_select %p188, %s18, 1
        %p190 = scmp.lt.s32.totalorder %s20, 2
        %s191 = scalar_select %p190, %s20, 2
        %p192 = scmp.lt.s32.totalorder %s19, 0
        %s193 = scalar_select %p192, %s19, 0
        %s194 = smul.addr %s191, 4
        %s195 = sadd.s32 %s193, %s194
        %s196 = smul.addr %s189, 12
        %s197 = sadd.s32 %s195, %s196
        %s198 = smul.addr %s197, 8
        %s199 = scalar_lea.vmem %s0, %s198
      $region28: #{_bvq_call.1} parent=23 // pred_fallthru
        _
    $region24: #{_bvq_call.1} parent=5 // pred_fallthru
      _
    %p200 = scmp.le.s32.totalorder 1, %s11
    %p201 = scmp.lt.s32.totalorder %s11, 7
    %p202 = pnand %p200, %p201
    %p203 = pneg %p202
    // Predicated region
    $region29: #{_bvq_call.1} parent=5 // pred_check
      _
    $region30: #{_bvq_call.1} parent=5 // pred_check_branch
      %205 = sbr.rel (%p202) target = $region32
    $region31: #{_bvq_call.1} parent=5 // pred_region
      %s206 = ssub.s32 %s11, 1
      %p207 = scmp.lt.s32.totalorder %s21, 1
      %s208 = scalar_select %p207, %s21, 1
      %p209 = scmp.lt.s32.totalorder %s23, 2
      %s210 = scalar_select %p209, %s23, 2
      %p211 = scmp.lt.s32.totalorder %s22, 0
      %s212 = scalar_select %p211, %s22, 0
      %s213 = smul.addr %s210, 4
      %s214 = sadd.s32 %s212, %s213
      %s215 = smul.addr %s208, 12
      %s216 = sadd.s32 %s214, %s215
      %s217 = smul.addr %s216, 8
      %s218 = scalar_lea.vmem %s0, %s217
      %p219 = pneg %p60
      %p220 = pneg %p57
      %p221 = pneg %p81
      %p222 = pneg %p78
      %p223 = pneg %p102
      %p224 = pneg %p99
      %p225 = pneg %p132
      %p226 = pneg %p129
      %p227 = scmp.lt.s32.totalorder %s21, 1
      %s228 = scalar_select %p227, %s21, 1
      %p229 = scmp.lt.s32.totalorder %s23, 2
      %s230 = scalar_select %p229, %s23, 2
      %p231 = scmp.lt.s32.totalorder %s22, 0
      %s232 = scalar_select %p231, %s22, 0
      %s233 = smul.addr %s230, 4
      %s234 = sadd.s32 %s232, %s233
      %s235 = smul.addr %s228, 12
      %s236 = sadd.s32 %s234, %s235
      %s237 = smul.addr %s236, 8
      %s238 = scalar_lea.vmem %s3, %s237
      %p239 = pneg %p160
      %p240 = pneg %p157
      %p241 = scmp.lt.s32.totalorder %s21, 1
      %s242 = scalar_select %p241, %s21, 1
      %p243 = scmp.lt.s32.totalorder %s22, 0
      %s244 = scalar_select %p243, %s22, 0
      %s245 = sadd.s32 %s244, %s242
      %s246 = smul.addr %s245, 4
      %s247 = scalar_lea.vmem %s4, %s246
      %p248 = scmp.lt.s32.totalorder %s21, 1
      %s249 = scalar_select %p248, %s21, 1
      %p250 = scmp.lt.s32.totalorder %s23, 2
      %s251 = scalar_select %p250, %s23, 2
      %p252 = scmp.lt.s32.totalorder %s22, 0
      %s253 = scalar_select %p252, %s22, 0
      %s254 = smul.addr %s251, 4
      %s255 = sadd.s32 %s253, %s254
      %s256 = smul.addr %s249, 12
      %s257 = sadd.s32 %s255, %s256
      %s258 = smul.addr %s257, 8
      %s259 = scalar_lea.vmem %s0, %s258
      %p260 = scmp.lt.s32.totalorder %s21, 1
      %s261 = scalar_select %p260, %s21, 1
      %p262 = scmp.lt.s32.totalorder %s23, 2
      %s263 = scalar_select %p262, %s23, 2
      %p264 = scmp.lt.s32.totalorder %s22, 0
      %s265 = scalar_select %p264, %s22, 0
      %s266 = smul.addr %s263, 4
      %s267 = sadd.s32 %s265, %s266
      %s268 = smul.addr %s261, 12
      %s269 = sadd.s32 %s267, %s268
      %s270 = smul.addr %s269, 8
      %s271 = scalar_lea.vmem %s3, %s270
      %p272 = scmp.lt.s32.totalorder %s21, 1
      %s273 = scalar_select %p272, %s21, 1
      %p274 = scmp.lt.s32.totalorder %s22, 0
      %s275 = scalar_select %p274, %s22, 0
      %s276 = sadd.s32 %s275, %s273
      %s277 = smul.addr %s276, 4
      %s278 = scalar_lea.vmem %s4, %s277
      %p279 = scmp.eq.s32.totalorder %s23, 0
      // Predicated region
      $region33: #{_bvq_call.1} parent=31 // pred_check
        %p280 = pneg %p279
      $region34: #{_bvq_call.1} parent=31 // pred_check_branch
        %282 = sbr.rel (%p280) target = $region36
      $region35: #{_bvq_call.1} parent=31 // pred_region
        %vm283 = vcmask 64512
        %284 = vst.msk [vmem:[#allocation2] sm:$0xff] %vm283, 0.0
        %285 = vst.msk [vmem:[#allocation2 + $0x8] sm:$0xff] %vm283, 0.0
        %286 = vst.msk [vmem:[#allocation2 + $0x10] sm:$0xff] %vm283, 0.0
        %287 = vst.msk [vmem:[#allocation2 + $0x18] sm:$0xff] %vm283, 0.0
      $region36: #{_bvq_call.1} parent=31 // pred_fallthru
        _
      %v288 = vld [vmem:[%s259] sm:$0xff]
      %v289 = vld [vmem:[%s259 + $0x8] sm:$0xff]
      %v290 = vld [vmem:[%s259 + $0x10] sm:$0xff]
      %v291 = vld [vmem:[%s259 + $0x18] sm:$0xff]
      %s292 = smul.u32 %s23, 64
      %s293 = scalar_lea.vmem %s1, %s292
      %v294 = vld [vmem:[%s293] sm:$0xff]
      %v295 = vld [vmem:[%s293 + $0x8] sm:$0xff]
      %v296 = vld [vmem:[%s293 + $0x10] sm:$0xff]
      %v297 = vld [vmem:[%s293 + $0x18] sm:$0xff]
      %v298 = vld [vmem:[%s293 + $0x20] sm:$0xff]
      %v299 = vld [vmem:[%s293 + $0x28] sm:$0xff]
      %v300 = vld [vmem:[%s293 + $0x30] sm:$0xff]
      %v301 = vld [vmem:[%s293 + $0x38] sm:$0xff]
      %s302 = scalar_lea.vmem %s2, %s292
      %v303 = vld [vmem:[%s302] sm:$0xff]
      %v304 = vld [vmem:[%s302 + $0x8] sm:$0xff]
      %v305 = vld [vmem:[%s302 + $0x10] sm:$0xff]
      %v306 = vld [vmem:[%s302 + $0x18] sm:$0xff]
      %v307 = vld [vmem:[%s302 + $0x20] sm:$0xff]
      %v308 = vld [vmem:[%s302 + $0x28] sm:$0xff]
      %v309 = vld [vmem:[%s302 + $0x30] sm:$0xff]
      %v310 = vld [vmem:[%s302 + $0x38] sm:$0xff]
      %v311 = vld [vmem:[#allocation2] sm:$0xff]
      %v312 = vld [vmem:[#allocation2 + $0x8] sm:$0xff]
      %v313 = vld [vmem:[#allocation2 + $0x10] sm:$0xff]
      %v314 = vld [vmem:[#allocation2 + $0x18] sm:$0xff]
      %v315 = vadd.f32 %v311, %v288
      %v316 = vadd.f32 %v312, %v289
      %v317 = vadd.f32 %v313, %v290
      %v318 = vadd.f32 %v314, %v291
      %vm319 = vcmask 261120
      %v321 = vsel %vm319, %v294, 0
      %v324 = vsel %vm319, %v295, 0
      %v327 = vsel %vm319, %v296, 0
      %v330 = vsel %vm319, %v297, 0
      %v333 = vsel %vm319, %v298, 0
      %v336 = vsel %vm319, %v299, 0
      %v339 = vsel %vm319, %v300, 0
      %v342 = vsel %vm319, %v301, 0
      %344 = vmatprep.subr.mxu0 0.0
      %345 = vmatpush1.msra.mxu0 %v315
      %346 = vmatprep.subr.mxu0 0.0
      %347 = vmatpush1.msra.mxu0 %v316
      %348 = vmatprep.subr.mxu0 0.0
      %349 = vmatpush1.msra.mxu0 %v317
      %350 = vmatprep.subr.mxu0 0.0
      %351 = vmatpush1.msra.mxu0 %v318
      %352 = vmatprep.subr.mxu0 0.0
      %353 = vmatpush1.msra.mxu0 0.0
      %354 = vmatprep.subr.mxu0 0.0
      %355 = vmatpush1.msra.mxu0 0.0
      %356 = vmatprep.subr.mxu0 0.0
      %357 = vmatpush1.msra.mxu0 0.0
      %358 = vmatprep.subr.mxu0 0.0
      %359 = vmatpush1.msra.mxu0 0.0
      %360 = vmatprep.subr.mxu0 0.0
      %361 = vmatpush1.msra.mxu0 0.0
      %362 = vmatprep.subr.mxu0 0.0
      %363 = vmatpush1.msra.mxu0 0.0
      %364 = vmatprep.subr.mxu0 0.0
      %365 = vmatpush1.msra.mxu0 0.0
      %366 = vmatprep.subr.mxu0 0.0
      %367 = vmatpush1.msra.mxu0 0.0
      %368 = vmatprep.subr.mxu0 0.0
      %369 = vmatpush1.msra.mxu0 0.0
      %370 = vmatprep.subr.mxu0 0.0
      %371 = vmatpush1.msra.mxu0 0.0
      %372 = vmatprep.subr.mxu0 0.0
      %373 = vmatpush1.msra.mxu0 0.0
      %374 = vmatprep.subr.mxu0 0.0
      %375 = vmatpush1.msra.mxu0 0.0
      %376 = vmatprep.subr.mxu0 0.0
      %377 = vmatpush1.msra.mxu0 0.0
      %378 = vmatprep.subr.mxu0 0.0
      %379 = vmatpush1.msra.mxu0 0.0
      %380 = vmatprep.subr.mxu0 0.0
      %381 = vmatpush1.msra.mxu0 0.0
      %382 = vmatprep.subr.mxu0 0.0
      %383 = vmatpush1.msra.mxu0 0.0
      %384 = vmatprep.subr.mxu0 0.0
      %385 = vmatpush1.msra.mxu0 0.0
      %386 = vmatprep.subr.mxu0 0.0
      %387 = vmatpush1.msra.mxu0 0.0
      %388 = vmatprep.subr.mxu0 0.0
      %389 = vmatpush1.msra.mxu0 0.0
      %390 = vmatprep.subr.mxu0 0.0
      %391 = vmatpush1.msra.mxu0 0.0
      %392 = vmatprep.subr.mxu0 0.0
      %393 = vmatpush1.msra.mxu0 0.0
      %394 = vmatprep.subr.mxu0 0.0
      %395 = vmatpush1.msra.mxu0 0.0
      %396 = vmatprep.subr.mxu0 0.0
      %397 = vmatpush1.msra.mxu0 0.0
      %398 = vmatprep.subr.mxu0 0.0
      %399 = vmatpush1.msra.mxu0 0.0
      %400 = vmatprep.subr.mxu0 0.0
      %401 = vmatpush1.msra.mxu0 0.0
      %402 = vmatprep.subr.mxu0 0.0
      %403 = vmatpush1.msra.mxu0 0.0
      %404 = vmatprep.subr.mxu0 0.0
      %405 = vmatpush1.msra.mxu0 0.0
      %406 = vmatprep.subr.mxu0 0.0
      %407 = vmatpush1.msra.mxu0 0.0
      %408 = vmatprep.mubr.f32.mxu0 0.0
      %409 = vmatmul.mubr.f32.gmra.mrb[0].mxu0 %v321
      %v410 = vpop.f32.mrb[0].mxu0
      %v411 = vadd.f32 0.0, %v410
      %v412 = vpop.f32.mrb[0].mxu0
      %413 = vmatprep.mubr.f32.mxu0 0.0
      %414 = vmatmul.mubr.f32.gmra.mrb[0].mxu0 %v324
      %v415 = vpop.f32.mrb[0].mxu0
      %v416 = vadd.f32 0.0, %v415
      %v417 = vpop.f32.mrb[0].mxu0
      %418 = vmatprep.mubr.f32.mxu0 0.0
      %419 = vmatmul.mubr.f32.gmra.mrb[0].mxu0 %v327
      %v420 = vpop.f32.mrb[0].mxu0
      %v421 = vadd.f32 0.0, %v420
      %v422 = vpop.f32.mrb[0].mxu0
      %423 = vmatprep.mubr.f32.mxu0 0.0
      %424 = vmatmul.mubr.f32.gmra.mrb[0].mxu0 %v330
      %v425 = vpop.f32.mrb[0].mxu0
      %v426 = vadd.f32 0.0, %v425
      %v427 = vpop.f32.mrb[0].mxu0
      %428 = vmatprep.mubr.f32.mxu0 0.0
      %429 = vmatmul.mubr.f32.gmra.mrb[0].mxu0 %v333
      %v430 = vpop.f32.mrb[0].mxu0
      %v431 = vadd.f32 0.0, %v430
      %v432 = vpop.f32.mrb[0].mxu0
      %433 = vmatprep.mubr.f32.mxu0 0.0
      %434 = vmatmul.mubr.f32.gmra.mrb[0].mxu0 %v336
      %v435 = vpop.f32.mrb[0].mxu0
      %v436 = vadd.f32 0.0, %v435
      %v437 = vpop.f32.mrb[0].mxu0
      %438 = vmatprep.mubr.f32.mxu0 0.0
      %439 = vmatmul.mubr.f32.gmra.mrb[0].mxu0 %v339
      %v440 = vpop.f32.mrb[0].mxu0
      %v441 = vadd.f32 0.0, %v440
      %v442 = vpop.f32.mrb[0].mxu0
      %443 = vmatprep.mubr.f32.mxu0 0.0
      %444 = vmatmul.mubr.f32.gmra.mrb[0].mxu0 %v342
      %v445 = vpop.f32.mrb[0].mxu0
      %v446 = vadd.f32 0.0, %v445
      %v447 = vpop.f32.mrb[0].mxu0
      %448 = vdwg.mxu0
      %450 = vset.pattern.permute.xlu0 0
      %451 = vperm.xlu0 %450, %v303
      %v452 = vpop.permute.xlu0 %451
      %455 = vset.pattern.permute.xlu0 0
      %456 = vperm.xlu0 %455, %v304
      %v457 = vpop.permute.xlu0 %456
      %460 = vset.pattern.permute.xlu0 0
      %461 = vperm.xlu0 %460, %v305
      %v462 = vpop.permute.xlu0 %461
      %465 = vset.pattern.permute.xlu0 0
      %466 = vperm.xlu0 %465, %v306
      %v467 = vpop.permute.xlu0 %466
      %470 = vset.pattern.permute.xlu0 0
      %471 = vperm.xlu0 %470, %v307
      %v472 = vpop.permute.xlu0 %471
      %475 = vset.pattern.permute.xlu0 0
      %476 = vperm.xlu0 %475, %v308
      %v477 = vpop.permute.xlu0 %476
      %480 = vset.pattern.permute.xlu0 0
      %481 = vperm.xlu0 %480, %v309
      %v482 = vpop.permute.xlu0 %481
      %485 = vset.pattern.permute.xlu0 0
      %486 = vperm.xlu0 %485, %v310
      %v487 = vpop.permute.xlu0 %486
      %v489 = vsub.f32 %v411, %v452
      %v490 = vsub.f32 %v416, %v457
      %v491 = vsub.f32 %v421, %v462
      %v492 = vsub.f32 %v426, %v467
      %v493 = vsub.f32 %v431, %v472
      %v494 = vsub.f32 %v436, %v477
      %v495 = vsub.f32 %v441, %v482
      %v496 = vsub.f32 %v446, %v487
      %v497 = vlaneseq
      %v498 = vshrl.u32 %v497, 7
      %v499 = vadd.s32 %v498, 8
      %v500 = vadd.s32 %v498, 16
      %v501 = vadd.s32 %v498, 24
      %v502 = vadd.s32 %v498, 32
      %v503 = vadd.s32 %v498, 40
      %v504 = vadd.s32 %v498, 48
      %v505 = vadd.s32 %v498, 56
      %vm506 = vcmask 64512
      %v507 = vsel %vm506, %v489, -inf
      %v508 = vsel %vm506, %v490, -inf
      %v509 = vsel %vm506, %v491, -inf
      %v510 = vsel %vm506, %v492, -inf
      %v511 = vsel %vm506, %v493, -inf
      %v512 = vmax.f32 %v507, %v511
      %v513 = vsel %vm506, %v494, -inf
      %v514 = vmax.f32 %v508, %v513
      %v515 = vsel %vm506, %v495, -inf
      %v516 = vmax.f32 %v509, %v515
      %v517 = vsel %vm506, %v496, -inf
      %v518 = vmax.f32 %v510, %v517
      %v519 = vmax.f32 %v512, %v514
      %v520 = vmax.f32 %v516, %v518
      %v521 = vmax.f32 %v519, %v520
      %v522 = vrot.slane %v521, 4
      %v523 = vmax.f32 %v521, %v522
      %v524 = vrot.slane %v523, 2
      %v525 = vmax.f32 %v523, %v524
      %v526 = vrot.slane %v525, 1
      %v527 = vmax.f32 %v525, %v526
      %vm528 = vcmp.eq.f32.partialorder %v489, %v527
      %vm529 = vcmp.eq.f32.partialorder %v490, %v527
      %vm530 = vcmp.eq.f32.partialorder %v491, %v527
      %vm531 = vcmp.eq.f32.partialorder %v492, %v527
      %vm532 = vcmp.eq.f32.partialorder %v493, %v527
      %vm533 = vcmp.eq.f32.partialorder %v494, %v527
      %vm534 = vcmp.eq.f32.partialorder %v495, %v527
      %vm535 = vcmp.eq.f32.partialorder %v496, %v527
      %v536 = vsel %vm528, %v498, 64
      %v537 = vsel %vm529, %v499, 64
      %v538 = vsel %vm530, %v500, 64
      %v539 = vsel %vm531, %v501, 64
      %v540 = vsel %vm532, %v502, 64
      %v541 = vsel %vm533, %v503, 64
      %v542 = vsel %vm534, %v504, 64
      %v543 = vsel %vm535, %v505, 64
      %v544 = vsel %vm506, %v536, 2147483647
      %v545 = vsel %vm506, %v537, 2147483647
      %v546 = vsel %vm506, %v538, 2147483647
      %v547 = vsel %vm506, %v539, 2147483647
      %v548 = vsel %vm506, %v540, 2147483647
      %vm549 = vcmp.lt.s32.totalorder %v544, %v548
      %v550 = vsel %vm549, %v544, %v548
      %v551 = vsel %vm506, %v541, 2147483647
      %vm552 = vcmp.lt.s32.totalorder %v545, %v551
      %v553 = vsel %vm552, %v545, %v551
      %v554 = vsel %vm506, %v542, 2147483647
      %vm555 = vcmp.lt.s32.totalorder %v546, %v554
      %v556 = vsel %vm555, %v546, %v554
      %v557 = vsel %vm506, %v543, 2147483647
      %vm558 = vcmp.lt.s32.totalorder %v547, %v557
      %v559 = vsel %vm558, %v547, %v557
      %vm560 = vcmp.lt.s32.totalorder %v550, %v553
      %v561 = vsel %vm560, %v550, %v553
      %vm562 = vcmp.lt.s32.totalorder %v556, %v559
      %v563 = vsel %vm562, %v556, %v559
      %vm564 = vcmp.lt.s32.totalorder %v561, %v563
      %v565 = vsel %vm564, %v561, %v563
      %v566 = vrot.slane %v565, 4
      %vm567 = vcmp.lt.s32.totalorder %v565, %v566
      %v568 = vsel %vm567, %v565, %v566
      %v569 = vrot.slane %v568, 2
      %vm570 = vcmp.lt.s32.totalorder %v568, %v569
      %v571 = vsel %vm570, %v568, %v569
      %v572 = vrot.slane %v571, 1
      %vm573 = vcmp.lt.s32.totalorder %v571, %v572
      %v574 = vsel %vm573, %v571, %v572
      %vm575 = vcmp.eq.s32.totalorder %v536, %v574
      %vm576 = vcmp.eq.s32.totalorder %v537, %v574
      %vm577 = vcmp.eq.s32.totalorder %v538, %v574
      %vm578 = vcmp.eq.s32.totalorder %v539, %v574
      %vm579 = vcmp.eq.s32.totalorder %v540, %v574
      %vm580 = vcmp.eq.s32.totalorder %v541, %v574
      %vm581 = vcmp.eq.s32.totalorder %v542, %v574
      %vm582 = vcmp.eq.s32.totalorder %v543, %v574
      %v583 = vsel %vm575, 1, 0
      %v584 = vsel %vm576, 1, 0
      %v585 = vsel %vm577, 1, 0
      %v586 = vsel %vm578, 1, 0
      %v587 = vsel %vm579, 1, 0
      %v588 = vsel %vm580, 1, 0
      %v589 = vsel %vm581, 1, 0
      %v590 = vsel %vm582, 1, 0
      %v591 = vcvt.s32.f32 %v583
      %v592 = vcvt.s32.f32 %v584
      %v593 = vcvt.s32.f32 %v585
      %v594 = vcvt.s32.f32 %v586
      %v595 = vcvt.s32.f32 %v587
      %v596 = vcvt.s32.f32 %v588
      %v597 = vcvt.s32.f32 %v589
      %v598 = vcvt.s32.f32 %v590
      %599 = vxpose.xlu0.b32.start [1/16] %v294, 128
      %600 = vxpose.xlu0.b32.cont [2/16] %v295, 128
      %601 = vxpose.xlu0.b32.cont [3/16] %v296, 128
      %602 = vxpose.xlu0.b32.cont [4/16] %v297, 128
      %603 = vxpose.xlu0.b32.cont [5/16] %v298, 128
      %604 = vxpose.xlu0.b32.cont [6/16] %v299, 128
      %605 = vxpose.xlu0.b32.cont [7/16] %v300, 128
      %606 = vxpose.xlu0.b32.cont [8/16] %v301, 128
      %607 = vxpose.xlu0.b32.cont [9/16] 0.0, 128
      %608 = vxpose.xlu0.b32.cont [10/16] 0.0, 128
      %609 = vxpose.xlu0.b32.cont [11/16] 0.0, 128
      %610 = vxpose.xlu0.b32.cont [12/16] 0.0, 128
      %611 = vxpose.xlu0.b32.cont [13/16] 0.0, 128
      %612 = vxpose.xlu0.b32.cont [14/16] 0.0, 128
      %613 = vxpose.xlu0.b32.cont [15/16] 0.0, 128
      %614 = vxpose.xlu0.b32.end [16/16] 0.0, 128
      %v615 = vpop.trf.xlu0
      %v616 = vpop.trf.xlu0
      %v617 = vpop.trf.xlu0
      %v618 = vpop.trf.xlu0
      %v619 = vpop.trf.xlu0
      %v620 = vpop.trf.xlu0
      %v621 = vpop.trf.xlu0
      %v622 = vpop.trf.xlu0
      %v623 = vpop.trf.xlu0
      %v624 = vpop.trf.xlu0
      %v625 = vpop.trf.xlu0
      %v626 = vpop.trf.xlu0
      %v627 = vpop.trf.xlu0
      %v628 = vpop.trf.xlu0
      %v629 = vpop.trf.xlu0
      %v630 = vpop.trf.xlu0
      %vm631 = vcmask 523264
      %v633 = vsel %vm631, %v615, 0
      %v636 = vsel %vm631, %v616, 0
      %v639 = vsel %vm631, %v617, 0
      %v642 = vsel %vm631, %v618, 0
      %644 = vmatprep.subr.mxu0 0.0
      %645 = vmatpush1.msra.mxu0 %v591
      %646 = vmatprep.subr.mxu0 0.0
      %647 = vmatpush1.msra.mxu0 %v592
      %648 = vmatprep.subr.mxu0 0.0
      %649 = vmatpush1.msra.mxu0 %v593
      %650 = vmatprep.subr.mxu0 0.0
      %651 = vmatpush1.msra.mxu0 %v594
      %652 = vmatprep.subr.mxu0 0.0
      %653 = vmatpush1.msra.mxu0 %v595
      %654 = vmatprep.subr.mxu0 0.0
      %655 = vmatpush1.msra.mxu0 %v596
      %656 = vmatprep.subr.mxu0 0.0
      %657 = vmatpush1.msra.mxu0 %v597
      %658 = vmatprep.subr.mxu0 0.0
      %659 = vmatpush1.msra.mxu0 %v598
      %660 = vmatprep.subr.mxu0 0.0
      %661 = vmatpush1.msra.mxu0 0.0
      %662 = vmatprep.subr.mxu0 0.0
      %663 = vmatpush1.msra.mxu0 0.0
      %664 = vmatprep.subr.mxu0 0.0
      %665 = vmatpush1.msra.mxu0 0.0
      %666 = vmatprep.subr.mxu0 0.0
      %667 = vmatpush1.msra.mxu0 0.0
      %668 = vmatprep.subr.mxu0 0.0
      %669 = vmatpush1.msra.mxu0 0.0
      %670 = vmatprep.subr.mxu0 0.0
      %671 = vmatpush1.msra.mxu0 0.0
      %672 = vmatprep.subr.mxu0 0.0
      %673 = vmatpush1.msra.mxu0 0.0
      %674 = vmatprep.subr.mxu0 0.0
      %675 = vmatpush1.msra.mxu0 0.0
      %676 = vmatprep.subr.mxu0 0.0
      %677 = vmatpush1.msra.mxu0 0.0
      %678 = vmatprep.subr.mxu0 0.0
      %679 = vmatpush1.msra.mxu0 0.0
      %680 = vmatprep.subr.mxu0 0.0
      %681 = vmatpush1.msra.mxu0 0.0
      %682 = vmatprep.subr.mxu0 0.0
      %683 = vmatpush1.msra.mxu0 0.0
      %684 = vmatprep.subr.mxu0 0.0
      %685 = vmatpush1.msra.mxu0 0.0
      %686 = vmatprep.subr.mxu0 0.0
      %687 = vmatpush1.msra.mxu0 0.0
      %688 = vmatprep.subr.mxu0 0.0
      %689 = vmatpush1.msra.mxu0 0.0
      %690 = vmatprep.subr.mxu0 0.0
      %691 = vmatpush1.msra.mxu0 0.0
      %692 = vmatprep.subr.mxu0 0.0
      %693 = vmatpush1.msra.mxu0 0.0
      %694 = vmatprep.subr.mxu0 0.0
      %695 = vmatpush1.msra.mxu0 0.0
      %696 = vmatprep.subr.mxu0 0.0
      %697 = vmatpush1.msra.mxu0 0.0
      %698 = vmatprep.subr.mxu0 0.0
      %699 = vmatpush1.msra.mxu0 0.0
      %700 = vmatprep.subr.mxu0 0.0
      %701 = vmatpush1.msra.mxu0 0.0
      %702 = vmatprep.subr.mxu0 0.0
      %703 = vmatpush1.msra.mxu0 0.0
      %704 = vmatprep.subr.mxu0 0.0
      %705 = vmatpush1.msra.mxu0 0.0
      %706 = vmatprep.subr.mxu0 0.0
      %707 = vmatpush1.msra.mxu0 0.0
      %708 = vmatprep.mubr.f32.mxu0 0.0
      %709 = vmatmul.mubr.f32.gmra.mrb[0].mxu0 %v633
      %v710 = vpop.f32.mrb[0].mxu0
      %v711 = vadd.f32 0.0, %v710
      %v712 = vpop.f32.mrb[0].mxu0
      %713 = vmatprep.mubr.f32.mxu0 0.0
      %714 = vmatmul.mubr.f32.gmra.mrb[0].mxu0 %v636
      %v715 = vpop.f32.mrb[0].mxu0
      %v716 = vadd.f32 0.0, %v715
      %v717 = vpop.f32.mrb[0].mxu0
      %718 = vmatprep.mubr.f32.mxu0 0.0
      %719 = vmatmul.mubr.f32.gmra.mrb[0].mxu0 %v639
      %v720 = vpop.f32.mrb[0].mxu0
      %v721 = vadd.f32 0.0, %v720
      %v722 = vpop.f32.mrb[0].mxu0
      %723 = vmatprep.mubr.f32.mxu0 0.0
      %724 = vmatmul.mubr.f32.gmra.mrb[0].mxu0 %v642
      %v725 = vpop.f32.mrb[0].mxu0
      %v726 = vadd.f32 0.0, %v725
      %v727 = vpop.f32.mrb[0].mxu0
      %728 = vdwg.mxu0
      %v729 = vsub.f32 %v315, %v711
      %v730 = vsub.f32 %v316, %v716
      %v731 = vsub.f32 %v317, %v721
      %v732 = vsub.f32 %v318, %v726
      %733 = vst.msk [vmem:[#allocation2] sm:$0xff] %vm506, %v729
      %734 = vst.msk [vmem:[#allocation2 + $0x8] sm:$0xff] %vm506, %v730
      %735 = vst.msk [vmem:[#allocation2 + $0x10] sm:$0xff] %vm506, %v731
      %736 = vst.msk [vmem:[#allocation2 + $0x18] sm:$0xff] %vm506, %v732
      %737 = vst.msk [vmem:[%s271] sm:$0xff] %vm506, %v711
      %738 = vst.msk [vmem:[%s271 + $0x8] sm:$0xff] %vm506, %v716
      %739 = vst.msk [vmem:[%s271 + $0x10] sm:$0xff] %vm506, %v721
      %740 = vst.msk [vmem:[%s271 + $0x18] sm:$0xff] %vm506, %v726
      %s741 = scalar_lea.vmem %s278, %s23
      %vm742 = vcmask 57344
      %743 = vst.msk [vmem:[%s741] sm:$0x1] %vm742, %v574
      %p744 = scmp.lt.s32.totalorder %s21, 1
      %s745 = scalar_select %p744, %s21, 1
      %p746 = scmp.lt.s32.totalorder %s23, 2
      %s747 = scalar_select %p746, %s23, 2
      %p748 = scmp.lt.s32.totalorder %s22, 0
      %s749 = scalar_select %p748, %s22, 0
      %s750 = smul.addr %s747, 4
      %s751 = sadd.s32 %s749, %s750
      %s752 = smul.addr %s745, 12
      %s753 = sadd.s32 %s751, %s752
      %s754 = smul.addr %s753, 8
      %s755 = scalar_lea.vmem %s3, %s754
      %p756 = scmp.lt.s32.totalorder %s21, 1
      %s757 = scalar_select %p756, %s21, 1
      %p758 = scmp.lt.s32.totalorder %s22, 0
      %s759 = scalar_select %p758, %s22, 0
      %s760 = sadd.s32 %s759, %s757
      %s761 = smul.addr %s760, 4
      %s762 = scalar_lea.vmem %s4, %s761
      // Predicated region
      $region37: #{_bvq_call.1} parent=31 // pred_check
        %p763 = pneg %p129
      $region38: #{_bvq_call.1} parent=31 // pred_check_branch
        %765 = sbr.rel (%p763) target = $region40
      $region39: #{_bvq_call.1} parent=31 // pred_region
        _
      $region40: #{_bvq_call.1} parent=31 // pred_fallthru
        _
      // Predicated region
      $region41: #{_bvq_call.1} parent=31 // pred_check
        %p766 = pneg %p157
      $region42: #{_bvq_call.1} parent=31 // pred_check_branch
        %768 = sbr.rel (%p766) target = $region44
      $region43: #{_bvq_call.1} parent=31 // pred_region
        _
      $region44: #{_bvq_call.1} parent=31 // pred_fallthru
        _
    $region32: #{_bvq_call.1} parent=5 // pred_fallthru
      _
    %p769 = scmp.le.s32.totalorder 2, %s11
    // Predicated region
    $region45: #{_bvq_call.1} parent=5 // pred_check
      %p770 = pneg %p769
    $region46: #{_bvq_call.1} parent=5 // pred_check_branch
      %772 = sbr.rel (%p770) target = $region48
    $region47: #{_bvq_call.1} parent=5 // pred_region
      %s773 = ssub.s32 %s11, 2
      // Predicated region
      $region49: #{_bvq_call.1} parent=47 // pred_check
        %p774 = pneg %p135
      $region50: #{_bvq_call.1} parent=47 // pred_check_branch
        %776 = sbr.rel (%p774) target = $region52
      $region51: #{_bvq_call.1} parent=47 // pred_region
        %p777 = scmp.lt.s32.totalorder %s24, 1
        %s778 = scalar_select %p777, %s24, 1
        %p779 = scmp.lt.s32.totalorder %s26, 2
        %s780 = scalar_select %p779, %s26, 2
        %p781 = scmp.lt.s32.totalorder %s25, 0
        %s782 = scalar_select %p781, %s25, 0
        %s783 = smul.addr %s780, 4
        %s784 = sadd.s32 %s782, %s783
        %s785 = smul.addr %s778, 12
        %s786 = sadd.s32 %s784, %s785
        %s787 = smul.addr %s786, 8
        %s788 = scalar_lea.vmem %s3, %s787
      $region52: #{_bvq_call.1} parent=47 // pred_fallthru
        _
      // Predicated region
      $region53: #{_bvq_call.1} parent=47 // pred_check
        %p789 = pneg %p163
      $region54: #{_bvq_call.1} parent=47 // pred_check_branch
        %791 = sbr.rel (%p789) target = $region56
      $region55: #{_bvq_call.1} parent=47 // pred_region
        %p792 = scmp.lt.s32.totalorder %s24, 1
        %s793 = scalar_select %p792, %s24, 1
        %p794 = scmp.lt.s32.totalorder %s25, 0
        %s795 = scalar_select %p794, %s25, 0
        %s796 = sadd.s32 %s795, %s793
        %s797 = smul.addr %s796, 4
        %s798 = scalar_lea.vmem %s4, %s797
      $region56: #{_bvq_call.1} parent=47 // pred_fallthru
        _
    $region48: #{_bvq_call.1} parent=5 // pred_fallthru
      _
  $region6: #{_bvq_call.1} parent=0 // loop_footer
    %s15 = sadd.s32 1, %s11
  $region7: #{_bvq_call.1} parent=0 // loop_footer_branch
    %10 = sbr.rel target = $region3
  $region8: #{_bvq_call.1} parent=0 // loop_exit
    _

</llo_original>
